<compile_context>
chip_gen: v7x
topology: tpu7x:2x2x1
jax: 0.10.0
libtpu: 0.0.40
codegen_flags: <defaults>
</compile_context>

<pallas_src>
import functools
import math

import jax
import jax.numpy as jnp
from jax.experimental import pallas as pl
from jax.experimental.pallas import tpu as pltpu


# ---------------------------------------------------------------------------
# small helpers
# ---------------------------------------------------------------------------
def _round_up(n, m):
    return ((n + m - 1) // m) * m


def _row_tiling(n_rows, max_tile=256):
    """Pick a row tile (multiple of 8 sublanes for f32) and padded row count."""
    if n_rows <= max_tile:
        tm = _round_up(n_rows, 8)
        return tm, tm
    tm = max_tile
    return tm, _round_up(n_rows, tm)


def _pad_rows(x2, n_padded):
    n = x2.shape[0]
    if n_padded == n:
        return x2
    return jnp.pad(x2, ((0, n_padded - n), (0, 0)))


# ---------------------------------------------------------------------------
# Kernel 1: fused multi-head attention (one batch element per grid step)
# ---------------------------------------------------------------------------
def _mha_kernel(xq_ref, xkv_ref, wq_ref, wk_ref, wv_ref, wo_ref,
                out_ref, scores_ref, *, n_heads):
    Sq = xq_ref.shape[1]
    D = xq_ref.shape[2]
    hd = D // n_heads
    scale = 1.0 / math.sqrt(hd)

    xq = xq_ref[0]          # (Sq, D)   native dtype
    xkv = xkv_ref[0]        # (Skv, D)

    # Projections: operands stay in their incoming dtype, f32 accumulation on MXU.
    q = jnp.dot(xq, wq_ref[...], preferred_element_type=jnp.float32)
    k = jnp.dot(xkv, wk_ref[...], preferred_element_type=jnp.float32)
    v = jnp.dot(xkv, wv_ref[...], preferred_element_type=jnp.float32)

    acc = jnp.zeros((Sq, D), jnp.float32)
    # TODO(synk): for long sequences the (Sq, Skv) score tile should be blocked
    # over kv (flash-style); the module returns the full softmax scores, so the
    # full tensor is materialized here (fine at these sizes).
    for h in range(n_heads):            # static unroll, n_heads is small
        lo = h * hd
        qh = q[:, lo:lo + hd]
        kh = k[:, lo:lo + hd]
        vh = v[:, lo:lo + hd]
        s = jnp.dot(qh, kh.T, preferred_element_type=jnp.float32) * scale
        s = s - jnp.max(s, axis=-1, keepdims=True)
        e = jnp.exp(s)
        p = e / jnp.sum(e, axis=-1, keepdims=True)
        scores_ref[0, h] = p.astype(scores_ref.dtype)
        oh = jnp.dot(p, vh, preferred_element_type=jnp.float32)
        # (concat_h oh) @ wo  ==  sum_h  oh @ wo[h*hd:(h+1)*hd, :]
        acc = acc + jnp.dot(oh.astype(wo_ref.dtype), wo_ref[lo:lo + hd, :],
                            preferred_element_type=jnp.float32)
    out_ref[0] = acc.astype(out_ref.dtype)


def multi_head_attention(x_q, x_kv, wq, wk, wv, wo, n_heads):
    """x_q: [B,Sq,D], x_kv: [B,Skv,D]; weights are [in,out]. Returns (out, scores)."""
    B, Sq, D = x_q.shape
    Skv = x_kv.shape[1]
    kernel = functools.partial(_mha_kernel, n_heads=n_heads)
    out, scores = pl.pallas_call(
        kernel,
        out_shape=(
            jax.ShapeDtypeStruct((B, Sq, D), x_q.dtype),
            jax.ShapeDtypeStruct((B, n_heads, Sq, Skv), x_q.dtype),
        ),
        grid_spec=pltpu.PrefetchScalarGridSpec(
            num_scalar_prefetch=0,
            grid=(B,),
            in_specs=[
                pl.BlockSpec((1, Sq, D), lambda b: (b, 0, 0)),
                pl.BlockSpec((1, Skv, D), lambda b: (b, 0, 0)),
                pl.BlockSpec((D, D), lambda b: (0, 0)),
                pl.BlockSpec((D, D), lambda b: (0, 0)),
                pl.BlockSpec((D, D), lambda b: (0, 0)),
                pl.BlockSpec((D, D), lambda b: (0, 0)),
            ],
            out_specs=(
                pl.BlockSpec((1, Sq, D), lambda b: (b, 0, 0)),
                pl.BlockSpec((1, n_heads, Sq, Skv), lambda b: (b, 0, 0, 0)),
            ),
        ),
        compiler_params=pltpu.CompilerParams(dimension_semantics=("parallel",)),
    )(x_q, x_kv, wq, wk, wv, wo)
    return out, scores


# ---------------------------------------------------------------------------
# Kernel 2: fused add + LayerNorm (row tiled)
# ---------------------------------------------------------------------------
def _add_ln_kernel(a_ref, b_ref, g_ref, bt_ref, o_ref):
    y = a_ref[...].astype(jnp.float32) + b_ref[...].astype(jnp.float32)
    mean = jnp.mean(y, axis=-1, keepdims=True)
    var = jnp.mean((y - mean) ** 2, axis=-1, keepdims=True)
    y_norm = (y - mean) * jax.lax.rsqrt(var + 1e-5)
    out = y_norm * g_ref[...].astype(jnp.float32) + bt_ref[...].astype(jnp.float32)
    o_ref[...] = out.astype(o_ref.dtype)


def add_layernorm(a, b, gamma, beta, *, max_tile_rows=256):
    B, S, D = a.shape
    N = B * S
    tm, n_pad = _row_tiling(N, max_tile_rows)
    a2 = _pad_rows(a.reshape(N, D), n_pad)
    b2 = _pad_rows(b.reshape(N, D), n_pad)
    out = pl.pallas_call(
        _add_ln_kernel,
        out_shape=jax.ShapeDtypeStruct((n_pad, D), a.dtype),
        grid_spec=pltpu.PrefetchScalarGridSpec(
            num_scalar_prefetch=0,
            grid=(n_pad // tm,),
            in_specs=[
                pl.BlockSpec((tm, D), lambda i: (i, 0)),
                pl.BlockSpec((tm, D), lambda i: (i, 0)),
                pl.BlockSpec((1, D), lambda i: (0, 0)),
                pl.BlockSpec((1, D), lambda i: (0, 0)),
            ],
            out_specs=pl.BlockSpec((tm, D), lambda i: (i, 0)),
        ),
        compiler_params=pltpu.CompilerParams(dimension_semantics=("parallel",)),
    )(a2, b2, gamma.reshape(1, D), beta.reshape(1, D))
    return out[:N].reshape(B, S, D)


# ---------------------------------------------------------------------------
# Kernel 3: fused position-wise FFN + residual + LayerNorm
#           rows tiled ("parallel"), d_ff streamed ("arbitrary") into f32 acc
# ---------------------------------------------------------------------------
def _ffn_ln_kernel(x_ref, w1_ref, w2_ref, g_ref, bt_ref, o_ref, acc_ref):
    k = pl.program_id(1)

    @pl.when(k == 0)
    def _():
        acc_ref[...] = jnp.zeros_like(acc_ref)

    # relu(x @ w1[:, tile]) @ w2[tile, :], accumulated over d_ff tiles.
    h = jnp.dot(x_ref[...], w1_ref[...], preferred_element_type=jnp.float32)
    h = jnp.maximum(h, 0.0)
    acc_ref[...] += jnp.dot(h.astype(w2_ref.dtype), w2_ref[...],
                            preferred_element_type=jnp.float32)

    @pl.when(k == pl.num_programs(1) - 1)
    def _():
        y = acc_ref[...] + x_ref[...].astype(jnp.float32)       # residual
        mean = jnp.mean(y, axis=-1, keepdims=True)
        var = jnp.mean((y - mean) ** 2, axis=-1, keepdims=True)
        y_norm = (y - mean) * jax.lax.rsqrt(var + 1e-5)
        out = y_norm * g_ref[...].astype(jnp.float32) + bt_ref[...].astype(jnp.float32)
        o_ref[...] = out.astype(o_ref.dtype)


def poswise_ffn(x, w1, w2, gamma, beta, *, max_tile_rows=256, max_ff_tile=512):
    """LayerNorm(relu(x@w1)@w2 + x) with per-feature gamma/beta (PoswiseFeedForwardNet)."""
    B, S, D = x.shape
    d_ff = w1.shape[1]
    N = B * S
    tm, n_pad = _row_tiling(N, max_tile_rows)
    tff = d_ff if (d_ff <= max_ff_tile or d_ff % max_ff_tile != 0) else max_ff_tile
    x2 = _pad_rows(x.reshape(N, D), n_pad)

    # Explicit VMEM budget: only raise the scoped limit when the tiles need it.
    itemsize = jnp.dtype(x.dtype).itemsize
    vmem_est = (2 * 2 * (D * tff + tff * D) * itemsize     # double-buffered weight tiles
                + 2 * 2 * tm * D * itemsize                # x / out double-buffered
                + tm * D * 4 + tm * tff * 4)               # f32 acc scratch + h temp
    cp = dict(dimension_semantics=("parallel", "arbitrary"))
    if vmem_est > 30 * 1024 * 1024:
        cp["vmem_limit_bytes"] = min(int(vmem_est * 1.5), 100 * 1024 * 1024)

    out = pl.pallas_call(
        _ffn_ln_kernel,
        out_shape=jax.ShapeDtypeStruct((n_pad, D), x.dtype),
        grid_spec=pltpu.PrefetchScalarGridSpec(
            num_scalar_prefetch=0,
            grid=(n_pad // tm, d_ff // tff),
            in_specs=[
                pl.BlockSpec((tm, D), lambda i, k: (i, 0)),
                pl.BlockSpec((D, tff), lambda i, k: (0, k)),
                pl.BlockSpec((tff, D), lambda i, k: (k, 0)),
                pl.BlockSpec((1, D), lambda i, k: (0, 0)),
                pl.BlockSpec((1, D), lambda i, k: (0, 0)),
            ],
            out_specs=pl.BlockSpec((tm, D), lambda i, k: (i, 0)),
            scratch_shapes=[pltpu.VMEM((tm, D), jnp.float32)],
        ),
        compiler_params=pltpu.CompilerParams(**cp),
    )(x2, w1, w2, gamma.reshape(1, D), beta.reshape(1, D))
    return out[:N].reshape(B, S, D)


# ---------------------------------------------------------------------------
# Decoder forward (Pallas) and pure-JAX reference
# ---------------------------------------------------------------------------
def decoder_forward(dec_inputs, enc_outputs, params, n_heads):
    x = dec_inputs
    dec_enc_attns = []
    for p in params:
        sa_out, _ = multi_head_attention(x, x, p["sa_wq"], p["sa_wk"], p["sa_wv"],
                                         p["sa_wo"], n_heads)
        h1 = add_layernorm(sa_out, x, p["ln1_g"], p["ln1_b"])
        ca_out, ca_scores = multi_head_attention(h1, enc_outputs, p["ca_wq"],
                                                 p["ca_wk"], p["ca_wv"], p["ca_wo"],
                                                 n_heads)
        h2 = add_layernorm(h1, ca_out, p["ln2_g"], p["ln2_b"])
        f = poswise_ffn(h2, p["ffn_w1"], p["ffn_w2"], p["lnf_g"], p["lnf_b"])
        x = add_layernorm(h2, f, p["ln3_g"], p["ln3_b"])
        dec_enc_attns.append(ca_scores)
    return x, dec_enc_attns


def _ln_ref(y, g, b, eps=1e-5):
    mean = jnp.mean(y, axis=-1, keepdims=True)
    var = jnp.mean((y - mean) ** 2, axis=-1, keepdims=True)
    return (y - mean) * jax.lax.rsqrt(var + eps) * g + b


def _mha_ref(x_q, x_kv, wq, wk, wv, wo, n_heads):
    B, Sq, D = x_q.shape
    Skv = x_kv.shape[1]
    hd = D // n_heads
    q = (x_q @ wq).reshape(B, Sq, n_heads, hd).transpose(0, 2, 1, 3)
    k = (x_kv @ wk).reshape(B, Skv, n_heads, hd).transpose(0, 2, 1, 3)
    v = (x_kv @ wv).reshape(B, Skv, n_heads, hd).transpose(0, 2, 1, 3)
    s = jnp.einsum("bhqd,bhkd->bhqk", q, k) / math.sqrt(hd)
    p = jax.nn.softmax(s.astype(jnp.float32), axis=-1).astype(x_q.dtype)
    o = jnp.einsum("bhqk,bhkd->bhqd", p, v)
    o = o.transpose(0, 2, 1, 3).reshape(B, Sq, D)
    return o @ wo, p


def decoder_ref(dec_inputs, enc_outputs, params, n_heads):
    x = dec_inputs
    attns = []
    for p in params:
        sa_out, _ = _mha_ref(x, x, p["sa_wq"], p["sa_wk"], p["sa_wv"], p["sa_wo"],
                             n_heads)
        h1 = _ln_ref(sa_out + x, p["ln1_g"], p["ln1_b"])
        ca_out, ca_p = _mha_ref(h1, enc_outputs, p["ca_wq"], p["ca_wk"], p["ca_wv"],
                                p["ca_wo"], n_heads)
        h2 = _ln_ref(h1 + ca_out, p["ln2_g"], p["ln2_b"])
        f = _ln_ref(jnp.maximum(h2 @ p["ffn_w1"], 0.0) @ p["ffn_w2"] + h2,
                    p["lnf_g"], p["lnf_b"])
        x = _ln_ref(h2 + f, p["ln3_g"], p["ln3_b"])
        attns.append(ca_p)
    return x, attns


def init_params(key, d_model, n_layers, n_heads):
    """Deterministic synthetic parameters (Linear weights stored as [in, out])."""
    d_ff = 4 * d_model

    def lin(k, fin, fout):
        return jax.random.normal(k, (fin, fout), jnp.float32) * (1.0 / math.sqrt(fin))

    def ln(k, d):
        kg, kb = jax.random.split(k)
        return (1.0 + 0.1 * jax.random.normal(kg, (d,), jnp.float32),
                0.1 * jax.random.normal(kb, (d,), jnp.float32))

    params = []
    for layer in range(n_layers):
        ks = jax.random.split(jax.random.fold_in(key, layer), 14)
        g1, b1 = ln(ks[10], d_model)
        g2, b2 = ln(ks[11], d_model)
        g3, b3 = ln(ks[12], d_model)
        gf, bf = ln(ks[13], d_model)
        params.append(dict(
            sa_wq=lin(ks[0], d_model, d_model), sa_wk=lin(ks[1], d_model, d_model),
            sa_wv=lin(ks[2], d_model, d_model), sa_wo=lin(ks[3], d_model, d_model),
            ca_wq=lin(ks[4], d_model, d_model), ca_wk=lin(ks[5], d_model, d_model),
            ca_wv=lin(ks[6], d_model, d_model), ca_wo=lin(ks[7], d_model, d_model),
            ffn_w1=lin(ks[8], d_model, d_ff), ffn_w2=lin(ks[9], d_ff, d_model),
            ln1_g=g1, ln1_b=b1, ln2_g=g2, ln2_b=b2, ln3_g=g3, ln3_b=b3,
            lnf_g=gf, lnf_b=bf,
        ))
    return params


if __name__ == "__main__":
    # Small shapes consistent with the module: batch=2, seq=8, d_model=32, 4 heads,
    # 2 decoder layers (d_ff = 4*d_model = 128).
    B, S, S_enc, d_model, n_heads, n_layers = 2, 8, 8, 32, 4, 2

    key = jax.random.PRNGKey(0)
    k_dec, k_enc, k_par = jax.random.split(key, 3)
    dec_inputs = jax.random.normal(k_dec, (B, S, d_model), dtype=jnp.float32)
    enc_outputs = jax.random.normal(k_enc, (B, S_enc, d_model), dtype=jnp.float32)
    params = init_params(k_par, d_model, n_layers, n_heads)

    out, attns = decoder_forward(dec_inputs, enc_outputs, params, n_heads)
    out = jax.block_until_ready(out)
    attns = [jax.block_until_ready(a) for a in attns]

    ref_out, ref_attns = decoder_ref(dec_inputs, enc_outputs, params, n_heads)

    assert out.shape == (B, S, d_model)
    assert len(attns) == n_layers
    assert jnp.allclose(out, ref_out, atol=2e-4, rtol=2e-4), \
        float(jnp.max(jnp.abs(out - ref_out)))
    for a, ra in zip(attns, ref_attns):
        assert a.shape == (B, n_heads, S, S_enc)
        assert jnp.allclose(a, ra, atol=2e-4, rtol=2e-4), \
            float(jnp.max(jnp.abs(a - ra)))

    print("KERNEL_OK")
</pallas_src>

<mosaic_0001>
module attributes {stable_mosaic.version = 11 : i64} {
  func.func @_mha_kernel(%arg0: i32, %arg1: memref<1x8x32xf32, #tpu.memory_space<vmem>>, %arg2: memref<1x8x32xf32, #tpu.memory_space<vmem>>, %arg3: memref<32x32xf32, #tpu.memory_space<vmem>>, %arg4: memref<32x32xf32, #tpu.memory_space<vmem>>, %arg5: memref<32x32xf32, #tpu.memory_space<vmem>>, %arg6: memref<32x32xf32, #tpu.memory_space<vmem>>, %arg7: memref<1x8x32xf32, #tpu.memory_space<vmem>>, %arg8: memref<1x4x8x8xf32, #tpu.memory_space<vmem>>) attributes {dimension_semantics = [#tpu.dimension_semantics<parallel>], iteration_bounds = array<i64: 2>, scalar_prefetch = 0 : i64, scratch_operands = 0 : i64, tpu.core_type = #tpu.core_type<tc>, window_params = [{transform_indices = @transform_0, window_bounds = array<i64: 1, 8, 32>}, {transform_indices = @transform_1, window_bounds = array<i64: 1, 8, 32>}, {pipeline_mode = #tpu.pipeline_mode<synchronous>, transform_indices = @transform_2, window_bounds = array<i64: 32, 32>}, {pipeline_mode = #tpu.pipeline_mode<synchronous>, transform_indices = @transform_3, window_bounds = array<i64: 32, 32>}, {pipeline_mode = #tpu.pipeline_mode<synchronous>, transform_indices = @transform_4, window_bounds = array<i64: 32, 32>}, {pipeline_mode = #tpu.pipeline_mode<synchronous>, transform_indices = @transform_5, window_bounds = array<i64: 32, 32>}, {transform_indices = @transform_6, window_bounds = array<i64: 1, 8, 32>}, {transform_indices = @transform_7, window_bounds = array<i64: 1, 4, 8, 8>}]} {
    %c0 = arith.constant 0 : index
    %c0_0 = arith.constant 0 : index
    %c0_1 = arith.constant 0 : index
    %0 = vector.load %arg1[%c0, %c0_0, %c0_1] : memref<1x8x32xf32, #tpu.memory_space<vmem>>, vector<1x8x32xf32>
    %1 = vector.shape_cast %0 : vector<1x8x32xf32> to vector<8x32xf32>
    %c0_2 = arith.constant 0 : index
    %c0_3 = arith.constant 0 : index
    %c0_4 = arith.constant 0 : index
    %2 = vector.load %arg2[%c0_2, %c0_3, %c0_4] : memref<1x8x32xf32, #tpu.memory_space<vmem>>, vector<1x8x32xf32>
    %3 = vector.shape_cast %2 : vector<1x8x32xf32> to vector<8x32xf32>
    %c0_5 = arith.constant 0 : index
    %c0_6 = arith.constant 0 : index
    %4 = vector.load %arg3[%c0_5, %c0_6] : memref<32x32xf32, #tpu.memory_space<vmem>>, vector<32x32xf32>
    %cst = arith.constant dense<0.000000e+00> : vector<8x32xf32>
    %5 = tpu.matmul %1, %4, %cst {dimension_numbers = #tpu.dot_dimension_numbers<[1], [0], [0], [1], [0, 0, 1, 1], [], []>} : vector<8x32xf32>, vector<32x32xf32>, vector<8x32xf32> -> vector<8x32xf32>
    %c0_7 = arith.constant 0 : index
    %c0_8 = arith.constant 0 : index
    %6 = vector.load %arg4[%c0_7, %c0_8] : memref<32x32xf32, #tpu.memory_space<vmem>>, vector<32x32xf32>
    %cst_9 = arith.constant dense<0.000000e+00> : vector<8x32xf32>
    %7 = tpu.matmul %3, %6, %cst_9 {dimension_numbers = #tpu.dot_dimension_numbers<[1], [0], [0], [1], [0, 0, 1, 1], [], []>} : vector<8x32xf32>, vector<32x32xf32>, vector<8x32xf32> -> vector<8x32xf32>
    %c0_10 = arith.constant 0 : index
    %c0_11 = arith.constant 0 : index
    %8 = vector.load %arg5[%c0_10, %c0_11] : memref<32x32xf32, #tpu.memory_space<vmem>>, vector<32x32xf32>
    %cst_12 = arith.constant dense<0.000000e+00> : vector<8x32xf32>
    %9 = tpu.matmul %3, %8, %cst_12 {dimension_numbers = #tpu.dot_dimension_numbers<[1], [0], [0], [1], [0, 0, 1, 1], [], []>} : vector<8x32xf32>, vector<32x32xf32>, vector<8x32xf32> -> vector<8x32xf32>
    %cst_13 = arith.constant 0.000000e+00 : f32
    %10 = vector.broadcast %cst_13 : f32 to vector<8x32xf32>
    %11 = vector.extract_strided_slice %5 {offsets = [0, 0], sizes = [8, 8], strides = [1, 1]} : vector<8x32xf32> to vector<8x8xf32>
    %12 = vector.extract_strided_slice %7 {offsets = [0, 0], sizes = [8, 8], strides = [1, 1]} : vector<8x32xf32> to vector<8x8xf32>
    %13 = vector.extract_strided_slice %9 {offsets = [0, 0], sizes = [8, 8], strides = [1, 1]} : vector<8x32xf32> to vector<8x8xf32>
    %14 = tpu.transpose %12, [1, 0] : vector<8x8xf32> -> vector<8x8xf32>
    %cst_14 = arith.constant dense<0.000000e+00> : vector<8x8xf32>
    %15 = tpu.matmul %11, %14, %cst_14 {dimension_numbers = #tpu.dot_dimension_numbers<[1], [0], [0], [1], [0, 0, 1, 1], [], []>} : vector<8x8xf32>, vector<8x8xf32>, vector<8x8xf32> -> vector<8x8xf32>
    %cst_15 = arith.constant 0.353553385 : f32
    %16 = vector.broadcast %cst_15 : f32 to vector<8x8xf32>
    %17 = arith.mulf %15, %16 : vector<8x8xf32>
    %cst_16 = arith.constant dense<0xFF800000> : vector<8xf32>
    %18 = vector.multi_reduction <maximumf>, %17, %cst_16 [1] : vector<8x8xf32> to vector<8xf32>
    %19 = vector.shape_cast %18 : vector<8xf32> to vector<8x1xf32>
    %20 = vector.broadcast %19 : vector<8x1xf32> to vector<8x8xf32>
    %21 = arith.subf %17, %20 : vector<8x8xf32>
    %22 = math.exp %21 : vector<8x8xf32>
    %cst_17 = arith.constant dense<0.000000e+00> : vector<8xf32>
    %23 = vector.multi_reduction <add>, %22, %cst_17 [1] : vector<8x8xf32> to vector<8xf32>
    %24 = vector.shape_cast %23 : vector<8xf32> to vector<8x1xf32>
    %25 = vector.broadcast %24 : vector<8x1xf32> to vector<8x8xf32>
    %26 = arith.divf %22, %25 : vector<8x8xf32>
    %c0_18 = arith.constant 0 : index
    %c0_19 = arith.constant 0 : index
    %c0_20 = arith.constant 0 : index
    %c0_21 = arith.constant 0 : index
    %27 = vector.load %arg8[%c0_18, %c0_19, %c0_20, %c0_21] : memref<1x4x8x8xf32, #tpu.memory_space<vmem>>, vector<1x1x8x8xf32>
    %28 = vector.shape_cast %27 : vector<1x1x8x8xf32> to vector<8x8xf32>
    %29 = vector.shape_cast %26 : vector<8x8xf32> to vector<1x1x8x8xf32>
    tpu.vector_store %arg8[%c0_18, %c0_19, %c0_20, %c0_21], %29 {strides = array<i32>} : memref<1x4x8x8xf32, #tpu.memory_space<vmem>>, vector<1x1x8x8xf32>,
    %cst_22 = arith.constant dense<0.000000e+00> : vector<8x8xf32>
    %30 = tpu.matmul %26, %13, %cst_22 {dimension_numbers = #tpu.dot_dimension_numbers<[1], [0], [0], [1], [0, 0, 1, 1], [], []>} : vector<8x8xf32>, vector<8x8xf32>, vector<8x8xf32> -> vector<8x8xf32>
    %c0_23 = arith.constant 0 : index
    %c0_24 = arith.constant 0 : index
    %31 = vector.load %arg6[%c0_23, %c0_24] : memref<32x32xf32, #tpu.memory_space<vmem>>, vector<8x32xf32>
    %cst_25 = arith.constant dense<0.000000e+00> : vector<8x32xf32>
    %32 = tpu.matmul %30, %31, %cst_25 {dimension_numbers = #tpu.dot_dimension_numbers<[1], [0], [0], [1], [0, 0, 1, 1], [], []>} : vector<8x8xf32>, vector<8x32xf32>, vector<8x32xf32> -> vector<8x32xf32>
    %33 = arith.addf %10, %32 : vector<8x32xf32>
    %34 = vector.extract_strided_slice %5 {offsets = [0, 8], sizes = [8, 8], strides = [1, 1]} : vector<8x32xf32> to vector<8x8xf32>
    %35 = vector.extract_strided_slice %7 {offsets = [0, 8], sizes = [8, 8], strides = [1, 1]} : vector<8x32xf32> to vector<8x8xf32>
    %36 = vector.extract_strided_slice %9 {offsets = [0, 8], sizes = [8, 8], strides = [1, 1]} : vector<8x32xf32> to vector<8x8xf32>
    %37 = tpu.transpose %35, [1, 0] : vector<8x8xf32> -> vector<8x8xf32>
    %cst_26 = arith.constant dense<0.000000e+00> : vector<8x8xf32>
    %38 = tpu.matmul %34, %37, %cst_26 {dimension_numbers = #tpu.dot_dimension_numbers<[1], [0], [0], [1], [0, 0, 1, 1], [], []>} : vector<8x8xf32>, vector<8x8xf32>, vector<8x8xf32> -> vector<8x8xf32>
    %cst_27 = arith.constant 0.353553385 : f32
    %39 = vector.broadcast %cst_27 : f32 to vector<8x8xf32>
    %40 = arith.mulf %38, %39 : vector<8x8xf32>
    %cst_28 = arith.constant dense<0xFF800000> : vector<8xf32>
    %41 = vector.multi_reduction <maximumf>, %40, %cst_28 [1] : vector<8x8xf32> to vector<8xf32>
    %42 = vector.shape_cast %41 : vector<8xf32> to vector<8x1xf32>
    %43 = vector.broadcast %42 : vector<8x1xf32> to vector<8x8xf32>
    %44 = arith.subf %40, %43 : vector<8x8xf32>
    %45 = math.exp %44 : vector<8x8xf32>
    %cst_29 = arith.constant dense<0.000000e+00> : vector<8xf32>
    %46 = vector.multi_reduction <add>, %45, %cst_29 [1] : vector<8x8xf32> to vector<8xf32>
    %47 = vector.shape_cast %46 : vector<8xf32> to vector<8x1xf32>
    %48 = vector.broadcast %47 : vector<8x1xf32> to vector<8x8xf32>
    %49 = arith.divf %45, %48 : vector<8x8xf32>
    %c0_30 = arith.constant 0 : index
    %c1 = arith.constant 1 : index
    %c0_31 = arith.constant 0 : index
    %c0_32 = arith.constant 0 : index
    %50 = vector.load %arg8[%c0_30, %c1, %c0_31, %c0_32] : memref<1x4x8x8xf32, #tpu.memory_space<vmem>>, vector<1x1x8x8xf32>
    %51 = vector.shape_cast %50 : vector<1x1x8x8xf32> to vector<8x8xf32>
    %52 = vector.shape_cast %49 : vector<8x8xf32> to vector<1x1x8x8xf32>
    tpu.vector_store %arg8[%c0_30, %c1, %c0_31, %c0_32], %52 {strides = array<i32>} : memref<1x4x8x8xf32, #tpu.memory_space<vmem>>, vector<1x1x8x8xf32>,
    %cst_33 = arith.constant dense<0.000000e+00> : vector<8x8xf32>
    %53 = tpu.matmul %49, %36, %cst_33 {dimension_numbers = #tpu.dot_dimension_numbers<[1], [0], [0], [1], [0, 0, 1, 1], [], []>} : vector<8x8xf32>, vector<8x8xf32>, vector<8x8xf32> -> vector<8x8xf32>
    %c8 = arith.constant 8 : index
    %c0_34 = arith.constant 0 : index
    %54 = vector.load %arg6[%c8, %c0_34] : memref<32x32xf32, #tpu.memory_space<vmem>>, vector<8x32xf32>
    %cst_35 = arith.constant dense<0.000000e+00> : vector<8x32xf32>
    %55 = tpu.matmul %53, %54, %cst_35 {dimension_numbers = #tpu.dot_dimension_numbers<[1], [0], [0], [1], [0, 0, 1, 1], [], []>} : vector<8x8xf32>, vector<8x32xf32>, vector<8x32xf32> -> vector<8x32xf32>
    %56 = arith.addf %33, %55 : vector<8x32xf32>
    %57 = vector.extract_strided_slice %5 {offsets = [0, 16], sizes = [8, 8], strides = [1, 1]} : vector<8x32xf32> to vector<8x8xf32>
    %58 = vector.extract_strided_slice %7 {offsets = [0, 16], sizes = [8, 8], strides = [1, 1]} : vector<8x32xf32> to vector<8x8xf32>
    %59 = vector.extract_strided_slice %9 {offsets = [0, 16], sizes = [8, 8], strides = [1, 1]} : vector<8x32xf32> to vector<8x8xf32>
    %60 = tpu.transpose %58, [1, 0] : vector<8x8xf32> -> vector<8x8xf32>
    %cst_36 = arith.constant dense<0.000000e+00> : vector<8x8xf32>
    %61 = tpu.matmul %57, %60, %cst_36 {dimension_numbers = #tpu.dot_dimension_numbers<[1], [0], [0], [1], [0, 0, 1, 1], [], []>} : vector<8x8xf32>, vector<8x8xf32>, vector<8x8xf32> -> vector<8x8xf32>
    %cst_37 = arith.constant 0.353553385 : f32
    %62 = vector.broadcast %cst_37 : f32 to vector<8x8xf32>
    %63 = arith.mulf %61, %62 : vector<8x8xf32>
    %cst_38 = arith.constant dense<0xFF800000> : vector<8xf32>
    %64 = vector.multi_reduction <maximumf>, %63, %cst_38 [1] : vector<8x8xf32> to vector<8xf32>
    %65 = vector.shape_cast %64 : vector<8xf32> to vector<8x1xf32>
    %66 = vector.broadcast %65 : vector<8x1xf32> to vector<8x8xf32>
    %67 = arith.subf %63, %66 : vector<8x8xf32>
    %68 = math.exp %67 : vector<8x8xf32>
    %cst_39 = arith.constant dense<0.000000e+00> : vector<8xf32>
    %69 = vector.multi_reduction <add>, %68, %cst_39 [1] : vector<8x8xf32> to vector<8xf32>
    %70 = vector.shape_cast %69 : vector<8xf32> to vector<8x1xf32>
    %71 = vector.broadcast %70 : vector<8x1xf32> to vector<8x8xf32>
    %72 = arith.divf %68, %71 : vector<8x8xf32>
    %c0_40 = arith.constant 0 : index
    %c2 = arith.constant 2 : index
    %c0_41 = arith.constant 0 : index
    %c0_42 = arith.constant 0 : index
    %73 = vector.load %arg8[%c0_40, %c2, %c0_41, %c0_42] : memref<1x4x8x8xf32, #tpu.memory_space<vmem>>, vector<1x1x8x8xf32>
    %74 = vector.shape_cast %73 : vector<1x1x8x8xf32> to vector<8x8xf32>
    %75 = vector.shape_cast %72 : vector<8x8xf32> to vector<1x1x8x8xf32>
    tpu.vector_store %arg8[%c0_40, %c2, %c0_41, %c0_42], %75 {strides = array<i32>} : memref<1x4x8x8xf32, #tpu.memory_space<vmem>>, vector<1x1x8x8xf32>,
    %cst_43 = arith.constant dense<0.000000e+00> : vector<8x8xf32>
    %76 = tpu.matmul %72, %59, %cst_43 {dimension_numbers = #tpu.dot_dimension_numbers<[1], [0], [0], [1], [0, 0, 1, 1], [], []>} : vector<8x8xf32>, vector<8x8xf32>, vector<8x8xf32> -> vector<8x8xf32>
    %c16 = arith.constant 16 : index
    %c0_44 = arith.constant 0 : index
    %77 = vector.load %arg6[%c16, %c0_44] : memref<32x32xf32, #tpu.memory_space<vmem>>, vector<8x32xf32>
    %cst_45 = arith.constant dense<0.000000e+00> : vector<8x32xf32>
    %78 = tpu.matmul %76, %77, %cst_45 {dimension_numbers = #tpu.dot_dimension_numbers<[1], [0], [0], [1], [0, 0, 1, 1], [], []>} : vector<8x8xf32>, vector<8x32xf32>, vector<8x32xf32> -> vector<8x32xf32>
    %79 = arith.addf %56, %78 : vector<8x32xf32>
    %80 = vector.extract_strided_slice %5 {offsets = [0, 24], sizes = [8, 8], strides = [1, 1]} : vector<8x32xf32> to vector<8x8xf32>
    %81 = vector.extract_strided_slice %7 {offsets = [0, 24], sizes = [8, 8], strides = [1, 1]} : vector<8x32xf32> to vector<8x8xf32>
    %82 = vector.extract_strided_slice %9 {offsets = [0, 24], sizes = [8, 8], strides = [1, 1]} : vector<8x32xf32> to vector<8x8xf32>
    %83 = tpu.transpose %81, [1, 0] : vector<8x8xf32> -> vector<8x8xf32>
    %cst_46 = arith.constant dense<0.000000e+00> : vector<8x8xf32>
    %84 = tpu.matmul %80, %83, %cst_46 {dimension_numbers = #tpu.dot_dimension_numbers<[1], [0], [0], [1], [0, 0, 1, 1], [], []>} : vector<8x8xf32>, vector<8x8xf32>, vector<8x8xf32> -> vector<8x8xf32>
    %cst_47 = arith.constant 0.353553385 : f32
    %85 = vector.broadcast %cst_47 : f32 to vector<8x8xf32>
    %86 = arith.mulf %84, %85 : vector<8x8xf32>
    %cst_48 = arith.constant dense<0xFF800000> : vector<8xf32>
    %87 = vector.multi_reduction <maximumf>, %86, %cst_48 [1] : vector<8x8xf32> to vector<8xf32>
    %88 = vector.shape_cast %87 : vector<8xf32> to vector<8x1xf32>
    %89 = vector.broadcast %88 : vector<8x1xf32> to vector<8x8xf32>
    %90 = arith.subf %86, %89 : vector<8x8xf32>
    %91 = math.exp %90 : vector<8x8xf32>
    %cst_49 = arith.constant dense<0.000000e+00> : vector<8xf32>
    %92 = vector.multi_reduction <add>, %91, %cst_49 [1] : vector<8x8xf32> to vector<8xf32>
    %93 = vector.shape_cast %92 : vector<8xf32> to vector<8x1xf32>
    %94 = vector.broadcast %93 : vector<8x1xf32> to vector<8x8xf32>
    %95 = arith.divf %91, %94 : vector<8x8xf32>
    %c0_50 = arith.constant 0 : index
    %c3 = arith.constant 3 : index
    %c0_51 = arith.constant 0 : index
    %c0_52 = arith.constant 0 : index
    %96 = vector.load %arg8[%c0_50, %c3, %c0_51, %c0_52] : memref<1x4x8x8xf32, #tpu.memory_space<vmem>>, vector<1x1x8x8xf32>
    %97 = vector.shape_cast %96 : vector<1x1x8x8xf32> to vector<8x8xf32>
    %98 = vector.shape_cast %95 : vector<8x8xf32> to vector<1x1x8x8xf32>
    tpu.vector_store %arg8[%c0_50, %c3, %c0_51, %c0_52], %98 {strides = array<i32>} : memref<1x4x8x8xf32, #tpu.memory_space<vmem>>, vector<1x1x8x8xf32>,
    %cst_53 = arith.constant dense<0.000000e+00> : vector<8x8xf32>
    %99 = tpu.matmul %95, %82, %cst_53 {dimension_numbers = #tpu.dot_dimension_numbers<[1], [0], [0], [1], [0, 0, 1, 1], [], []>} : vector<8x8xf32>, vector<8x8xf32>, vector<8x8xf32> -> vector<8x8xf32>
    %c24 = arith.constant 24 : index
    %c0_54 = arith.constant 0 : index
    %100 = vector.load %arg6[%c24, %c0_54] : memref<32x32xf32, #tpu.memory_space<vmem>>, vector<8x32xf32>
    %cst_55 = arith.constant dense<0.000000e+00> : vector<8x32xf32>
    %101 = tpu.matmul %99, %100, %cst_55 {dimension_numbers = #tpu.dot_dimension_numbers<[1], [0], [0], [1], [0, 0, 1, 1], [], []>} : vector<8x8xf32>, vector<8x32xf32>, vector<8x32xf32> -> vector<8x32xf32>
    %102 = arith.addf %79, %101 : vector<8x32xf32>
    %c0_56 = arith.constant 0 : index
    %c0_57 = arith.constant 0 : index
    %c0_58 = arith.constant 0 : index
    %103 = vector.load %arg7[%c0_56, %c0_57, %c0_58] : memref<1x8x32xf32, #tpu.memory_space<vmem>>, vector<1x8x32xf32>
    %104 = vector.shape_cast %103 : vector<1x8x32xf32> to vector<8x32xf32>
    %105 = vector.shape_cast %102 : vector<8x32xf32> to vector<1x8x32xf32>
    tpu.vector_store %arg7[%c0_56, %c0_57, %c0_58], %105 {strides = array<i32>} : memref<1x8x32xf32, #tpu.memory_space<vmem>>, vector<1x8x32xf32>,
    return
  }
  func.func @transform_0(%arg0: i32) -> (i32, i32, i32) {
    %c0_i32 = arith.constant 0 : i32
    %c0_i32_0 = arith.constant 0 : i32
    %c0_i32_1 = arith.constant 0 : i32
    return %arg0, %c0_i32, %c0_i32_0 : i32, i32, i32
  }
  func.func @transform_1(%arg0: i32) -> (i32, i32, i32) {
    %c0_i32 = arith.constant 0 : i32
    %c0_i32_0 = arith.constant 0 : i32
    %c0_i32_1 = arith.constant 0 : i32
    return %arg0, %c0_i32, %c0_i32_0 : i32, i32, i32
  }
  func.func @transform_2(%arg0: i32) -> (i32, i32) {
    %c0_i32 = arith.constant 0 : i32
    %c0_i32_0 = arith.constant 0 : i32
    %c0_i32_1 = arith.constant 0 : i32
    return %c0_i32, %c0_i32_0 : i32, i32
  }
  func.func @transform_3(%arg0: i32) -> (i32, i32) {
    %c0_i32 = arith.constant 0 : i32
    %c0_i32_0 = arith.constant 0 : i32
    %c0_i32_1 = arith.constant 0 : i32
    return %c0_i32, %c0_i32_0 : i32, i32
  }
  func.func @transform_4(%arg0: i32) -> (i32, i32) {
    %c0_i32 = arith.constant 0 : i32
    %c0_i32_0 = arith.constant 0 : i32
    %c0_i32_1 = arith.constant 0 : i32
    return %c0_i32, %c0_i32_0 : i32, i32
  }
  func.func @transform_5(%arg0: i32) -> (i32, i32) {
    %c0_i32 = arith.constant 0 : i32
    %c0_i32_0 = arith.constant 0 : i32
    %c0_i32_1 = arith.constant 0 : i32
    return %c0_i32, %c0_i32_0 : i32, i32
  }
  func.func @transform_6(%arg0: i32) -> (i32, i32, i32) {
    %c0_i32 = arith.constant 0 : i32
    %c0_i32_0 = arith.constant 0 : i32
    %c0_i32_1 = arith.constant 0 : i32
    return %arg0, %c0_i32, %c0_i32_0 : i32, i32, i32
  }
  func.func @transform_7(%arg0: i32) -> (i32, i32, i32, i32) {
    %c0_i32 = arith.constant 0 : i32
    %c0_i32_0 = arith.constant 0 : i32
    %c0_i32_1 = arith.constant 0 : i32
    %c0_i32_2 = arith.constant 0 : i32
    return %arg0, %c0_i32, %c0_i32_0, %c0_i32_1 : i32, i32, i32, i32
  }
}

</mosaic_0001>

<llo_original>
// kernel: tpu_custom_call.1
$region0: #{tpu_custom_call.1}
  #allocation0 [shape = 'u32[]', space=smem, size = 0x4, offset = 0x4, fixed_abs, tag = 'smem constant byte address 0x4 - core index']
  #allocation1 [shape = 'u32[144,128]{1,0:T(1,128)}', space=vmem, size = 0x12000, scoped, tag = 'internal scratch']
  %s0 = inlined_call_operand.hbm [shape: f32[2,8,32], index: 0, kind: input, shape index: {}]
  %s1 = inlined_call_operand.hbm [shape: f32[2,8,32], index: 1, kind: input, shape index: {}]
  %s2 = inlined_call_operand.hbm [shape: f32[32,32], index: 2, kind: input, shape index: {}]
  %s3 = inlined_call_operand.hbm [shape: f32[32,32], index: 3, kind: input, shape index: {}]
  %s4 = inlined_call_operand.hbm [shape: f32[32,32], index: 4, kind: input, shape index: {}]
  %s5 = inlined_call_operand.hbm [shape: f32[32,32], index: 5, kind: input, shape index: {}]
  %s6 = inlined_call_operand.hbm [shape: f32[2,8,32], index: 6, kind: output, shape index: {0}]
  %s7 = inlined_call_operand.hbm [shape: f32[2,4,8,8], index: 7, kind: output, shape index: {1}]
  %8 = xla_tuple %s6, %s7
  %s9 = sld [smem:[#allocation0]]
  $region89: #{tpu_custom_call.1} parent=0
    _
  %s11 = ssub.s32 1, %s9
  %s12 = scalar_select 0, %s11, %s9
  $region1: #{tpu_custom_call.1} parent=0
    #allocation2 [shape = 'u8[8192]{0}', space=vmem, size = 0x2000, scoped, tag = 'input window, operand 0']
    #allocation3 [shape = 's32[2]{0}', space=sflag, size = 0x8, scoped, tag = 'scoped memory for tpu_custom_call.1']
    #allocation4 [shape = 's32[2]{0}', space=sflag, size = 0x8, scoped, tag = 'scoped memory for tpu_custom_call.1']
    #allocation5 [shape = 'u8[8192]{0}', space=vmem, size = 0x2000, scoped, tag = 'input window, operand 1']
    #allocation6 [shape = 's32[2]{0}', space=sflag, size = 0x8, scoped, tag = 'scoped memory for tpu_custom_call.1']
    #allocation7 [shape = 'u8[16384]{0}', space=vmem, size = 0x4000, scoped, tag = 'input window, operand 2, single buffered']
    #allocation8 [shape = 'u8[16384]{0}', space=vmem, size = 0x4000, scoped, tag = 'input window, operand 3, single buffered']
    #allocation9 [shape = 's32[1]{0}', space=sflag, size = 0x4, scoped, tag = 'scoped memory for tpu_custom_call.1']
    #allocation10 [shape = 'u8[16384]{0}', space=vmem, size = 0x4000, scoped, tag = 'input window, operand 4, single buffered']
    #allocation11 [shape = 'u8[16384]{0}', space=vmem, size = 0x4000, scoped, tag = 'input window, operand 5, single buffered']
    #allocation12 [shape = 's32[1]{0}', space=sflag, size = 0x4, scoped, tag = 'scoped memory for tpu_custom_call.1']
    #allocation13 [shape = 'u8[8192]{0}', space=vmem, size = 0x2000, scoped, tag = 'output window, operand 0']
    #allocation14 [shape = 'u8[32768]{0}', space=vmem, size = 0x8000, scoped, tag = 'output window, operand 1']
    #allocation15 [shape = 's32[2]{0}', space=sflag, size = 0x8, scoped, tag = 'scoped memory for tpu_custom_call.1']
    %13 = vsyncpa [#allocation3], 0
    %s14 = scalar_lea.sflag [#allocation3], 1
    %15 = vsyncpa %s14, 0
    %16 = vsyncpa [#allocation6], 0
    %s17 = scalar_lea.sflag [#allocation6], 1
    %18 = vsyncpa %s17, 0
    %19 = vsyncpa [#allocation9], 0
    %20 = vsyncpa [#allocation12], 0
    %21 = vsyncpa [#allocation4], 0
    %s22 = scalar_lea.sflag [#allocation4], 1
    %23 = vsyncpa %s22, 0
    %24 = vsyncpa [#allocation15], 0
    %s25 = scalar_lea.sflag [#allocation15], 1
    %26 = vsyncpa %s25, 0
    loop: start=0, step=1, limit=4
    $region2: #{tpu_custom_call.1} parent=1 // loop_pre_header
      _
    $region3: #{tpu_custom_call.1} parent=1 // loop_header
      %s28 = sphi 0, %s32
      %p29 = scmp.ge.s32.totalorder %s28, 4
      %s38 = sphi 0, %s40
      %s41 = sphi 0, %s38
      %s42 = sphi 0, %s41
      %s58 = sphi 0, %s42
      %s64 = sphi 0, %s66
      %s67 = sphi 0, %s64
      %s68 = sphi 0, %s67
      %s84 = sphi 0, %s68
      %s88 = sphi 0, %s88
      %s90 = sphi 0, %s88
      %s91 = sphi 0, %s90
      %s105 = sphi 0, %s91
      %s109 = sphi 0, %s109
      %s111 = sphi 0, %s109
      %s112 = sphi 0, %s111
      %s126 = sphi 0, %s112
      %s130 = sphi 0, %s130
      %s132 = sphi 0, %s130
      %s133 = sphi 0, %s132
      %s147 = sphi 0, %s133
      %s151 = sphi 0, %s151
      %s153 = sphi 0, %s151
      %s154 = sphi 0, %s153
      %s168 = sphi 0, %s154
      %s174 = sphi 0, %s176
      %s177 = sphi 0, %s174
      %s178 = sphi 0, %s177
      %s194 = sphi 0, %s178
      %s200 = sphi 0, %s202
      %s203 = sphi 0, %s200
      %s204 = sphi 0, %s203
      %s220 = sphi 0, %s204
    $region4: #{tpu_custom_call.1} parent=1 // loop_header_branch
      %31 = sbr.rel (%p29) target = $region8
    $region5: #{tpu_custom_call.1} parent=1 // loop_body
      %s33 = ssub.s32 %s28, 1
      %s34 = ssub.s32 %s28, 2
      %s35 = sadd.s32 %s28, 1
      %s36 = ssub.s32 %s28, %s35
      %p37 = scmp.eq.s32.totalorder %s36, 0
      %s39 = sadd.s32 %s38, 1
      %s40 = scalar_select %p37, %s38, %s39
      %p43 = pneg %p37
      %p44 = scmp.eq.s32.totalorder %s28, 1
      %p45 = por %p43, %p44
      %p46 = scmp.ne.s32.totalorder %s38, %s41
      %p47 = scmp.eq.s32.totalorder %s28, 0
      %p48 = por %p46, %p47
      %p49 = scmp.ne.s32.totalorder %s38, %s41
      %p50 = scmp.eq.s32.totalorder %s33, 1
      %p51 = por %p49, %p50
      %p52 = scmp.ne.s32.totalorder %s41, %s42
      %p53 = scmp.eq.s32.totalorder %s33, 0
      %p54 = por %p52, %p53
      %p55 = scmp.ne.s32.totalorder %s41, %s42
      %p56 = scmp.eq.s32.totalorder %s34, 1
      %p57 = por %p55, %p56
      %p59 = scmp.ne.s32.totalorder %s42, %s58
      %p60 = scmp.eq.s32.totalorder %s34, 0
      %p61 = por %p59, %p60
      %s62 = ssub.s32 %s28, %s35
      %p63 = scmp.eq.s32.totalorder %s62, 0
      %s65 = sadd.s32 %s64, 1
      %s66 = scalar_select %p63, %s64, %s65
      %p69 = pneg %p63
      %p70 = scmp.eq.s32.totalorder %s28, 1
      %p71 = por %p69, %p70
      %p72 = scmp.ne.s32.totalorder %s64, %s67
      %p73 = scmp.eq.s32.totalorder %s28, 0
      %p74 = por %p72, %p73
      %p75 = scmp.ne.s32.totalorder %s64, %s67
      %p76 = scmp.eq.s32.totalorder %s33, 1
      %p77 = por %p75, %p76
      %p78 = scmp.ne.s32.totalorder %s67, %s68
      %p79 = scmp.eq.s32.totalorder %s33, 0
      %p80 = por %p78, %p79
      %p81 = scmp.ne.s32.totalorder %s67, %s68
      %p82 = scmp.eq.s32.totalorder %s34, 1
      %p83 = por %p81, %p82
      %p85 = scmp.ne.s32.totalorder %s68, %s84
      %p86 = scmp.eq.s32.totalorder %s34, 0
      %p87 = por %p85, %p86
      %s89 = sadd.s32 %s88, 1
      %p92 = scmp.eq.s32.totalorder %s28, 1
      %p93 = scmp.ne.s32.totalorder %s88, %s90
      %p94 = scmp.eq.s32.totalorder %s28, 0
      %p95 = por %p93, %p94
      %p96 = scmp.ne.s32.totalorder %s88, %s90
      %p97 = scmp.eq.s32.totalorder %s33, 1
      %p98 = por %p96, %p97
      %p99 = scmp.ne.s32.totalorder %s90, %s91
      %p100 = scmp.eq.s32.totalorder %s33, 0
      %p101 = por %p99, %p100
      %p102 = scmp.ne.s32.totalorder %s90, %s91
      %p103 = scmp.eq.s32.totalorder %s34, 1
      %p104 = por %p102, %p103
      %p106 = scmp.ne.s32.totalorder %s91, %s105
      %p107 = scmp.eq.s32.totalorder %s34, 0
      %p108 = por %p106, %p107
      %s110 = sadd.s32 %s109, 1
      %p113 = scmp.eq.s32.totalorder %s28, 1
      %p114 = scmp.ne.s32.totalorder %s109, %s111
      %p115 = scmp.eq.s32.totalorder %s28, 0
      %p116 = por %p114, %p115
      %p117 = scmp.ne.s32.totalorder %s109, %s111
      %p118 = scmp.eq.s32.totalorder %s33, 1
      %p119 = por %p117, %p118
      %p120 = scmp.ne.s32.totalorder %s111, %s112
      %p121 = scmp.eq.s32.totalorder %s33, 0
      %p122 = por %p120, %p121
      %p123 = scmp.ne.s32.totalorder %s111, %s112
      %p124 = scmp.eq.s32.totalorder %s34, 1
      %p125 = por %p123, %p124
      %p127 = scmp.ne.s32.totalorder %s112, %s126
      %p128 = scmp.eq.s32.totalorder %s34, 0
      %p129 = por %p127, %p128
      %s131 = sadd.s32 %s130, 1
      %p134 = scmp.eq.s32.totalorder %s28, 1
      %p135 = scmp.ne.s32.totalorder %s130, %s132
      %p136 = scmp.eq.s32.totalorder %s28, 0
      %p137 = por %p135, %p136
      %p138 = scmp.ne.s32.totalorder %s130, %s132
      %p139 = scmp.eq.s32.totalorder %s33, 1
      %p140 = por %p138, %p139
      %p141 = scmp.ne.s32.totalorder %s132, %s133
      %p142 = scmp.eq.s32.totalorder %s33, 0
      %p143 = por %p141, %p142
      %p144 = scmp.ne.s32.totalorder %s132, %s133
      %p145 = scmp.eq.s32.totalorder %s34, 1
      %p146 = por %p144, %p145
      %p148 = scmp.ne.s32.totalorder %s133, %s147
      %p149 = scmp.eq.s32.totalorder %s34, 0
      %p150 = por %p148, %p149
      %s152 = sadd.s32 %s151, 1
      %p155 = scmp.eq.s32.totalorder %s28, 1
      %p156 = scmp.ne.s32.totalorder %s151, %s153
      %p157 = scmp.eq.s32.totalorder %s28, 0
      %p158 = por %p156, %p157
      %p159 = scmp.ne.s32.totalorder %s151, %s153
      %p160 = scmp.eq.s32.totalorder %s33, 1
      %p161 = por %p159, %p160
      %p162 = scmp.ne.s32.totalorder %s153, %s154
      %p163 = scmp.eq.s32.totalorder %s33, 0
      %p164 = por %p162, %p163
      %p165 = scmp.ne.s32.totalorder %s153, %s154
      %p166 = scmp.eq.s32.totalorder %s34, 1
      %p167 = por %p165, %p166
      %p169 = scmp.ne.s32.totalorder %s154, %s168
      %p170 = scmp.eq.s32.totalorder %s34, 0
      %p171 = por %p169, %p170
      %s172 = ssub.s32 %s28, %s35
      %p173 = scmp.eq.s32.totalorder %s172, 0
      %s175 = sadd.s32 %s174, 1
      %s176 = scalar_select %p173, %s174, %s175
      %p179 = pneg %p173
      %p180 = scmp.eq.s32.totalorder %s28, 1
      %p181 = por %p179, %p180
      %p182 = scmp.ne.s32.totalorder %s174, %s177
      %p183 = scmp.eq.s32.totalorder %s28, 0
      %p184 = por %p182, %p183
      %p185 = scmp.ne.s32.totalorder %s174, %s177
      %p186 = scmp.eq.s32.totalorder %s33, 1
      %p187 = por %p185, %p186
      %p188 = scmp.ne.s32.totalorder %s177, %s178
      %p189 = scmp.eq.s32.totalorder %s33, 0
      %p190 = por %p188, %p189
      %p191 = scmp.ne.s32.totalorder %s177, %s178
      %p192 = scmp.eq.s32.totalorder %s34, 1
      %p193 = por %p191, %p192
      %p195 = scmp.ne.s32.totalorder %s178, %s194
      %p196 = scmp.eq.s32.totalorder %s34, 0
      %p197 = por %p195, %p196
      %s198 = ssub.s32 %s28, %s35
      %p199 = scmp.eq.s32.totalorder %s198, 0
      %s201 = sadd.s32 %s200, 1
      %s202 = scalar_select %p199, %s200, %s201
      %p205 = pneg %p199
      %p206 = scmp.eq.s32.totalorder %s28, 1
      %p207 = por %p205, %p206
      %p208 = scmp.ne.s32.totalorder %s200, %s203
      %p209 = scmp.eq.s32.totalorder %s28, 0
      %p210 = por %p208, %p209
      %p211 = scmp.ne.s32.totalorder %s200, %s203
      %p212 = scmp.eq.s32.totalorder %s33, 1
      %p213 = por %p211, %p212
      %p214 = scmp.ne.s32.totalorder %s203, %s204
      %p215 = scmp.eq.s32.totalorder %s33, 0
      %p216 = por %p214, %p215
      %p217 = scmp.ne.s32.totalorder %s203, %s204
      %p218 = scmp.eq.s32.totalorder %s34, 1
      %p219 = por %p217, %p218
      %p221 = scmp.ne.s32.totalorder %s204, %s220
      %p222 = scmp.eq.s32.totalorder %s34, 0
      %p223 = por %p221, %p222
      %p224 = scmp.le.s32.totalorder 1, %s28
      %p225 = scmp.lt.s32.totalorder %s28, 3
      %p226 = pnand %p224, %p225
      %p227 = pneg %p226
      // Predicated region
      $region9: #{tpu_custom_call.1} parent=5 // pred_check
        _
      $region10: #{tpu_custom_call.1} parent=5 // pred_check_branch
        %229 = sbr.rel (%p226) target = $region12
      $region11: #{tpu_custom_call.1} parent=5 // pred_region
        %s230 = ssub.s32 %s28, 1
        // Predicated region
        $region13: #{tpu_custom_call.1} parent=11 // pred_check
          %p231 = pneg %p101
        $region14: #{tpu_custom_call.1} parent=11 // pred_check_branch
          %233 = sbr.rel (%p231) target = $region16
        $region15: #{tpu_custom_call.1} parent=11 // pred_region
          %s235 = ssub.s32 512, 512
          %236 = vsyncadd [#allocation6], %s235
          %s237 = sshll.u32 [#allocation7], 4
          %s238 = int_to_ptr.vmem [resolvable:$true] %s237
          %243 = dma.hbm_to_vmem [thread:$0]  %s2, 512, %s238, [#allocation6], 128, 128, 8
        $region16: #{tpu_custom_call.1} parent=11 // pred_fallthru
          _
        // Predicated region
        $region17: #{tpu_custom_call.1} parent=11 // pred_check
          %p244 = pneg %p122
        $region18: #{tpu_custom_call.1} parent=11 // pred_check_branch
          %246 = sbr.rel (%p244) target = $region20
        $region19: #{tpu_custom_call.1} parent=11 // pred_region
          %s248 = ssub.s32 512, 512
          %249 = vsyncadd [#allocation9], %s248
          %s250 = sshll.u32 [#allocation8], 4
          %s251 = int_to_ptr.vmem [resolvable:$true] %s250
          %256 = dma.hbm_to_vmem [thread:$0]  %s3, 512, %s251, [#allocation9], 128, 128, 8
        $region20: #{tpu_custom_call.1} parent=11 // pred_fallthru
          _
        // Predicated region
        $region21: #{tpu_custom_call.1} parent=11 // pred_check
          %p257 = pneg %p143
        $region22: #{tpu_custom_call.1} parent=11 // pred_check_branch
          %259 = sbr.rel (%p257) target = $region24
        $region23: #{tpu_custom_call.1} parent=11 // pred_region
          %s261 = ssub.s32 512, 512
          %262 = vsyncadd [#allocation9], %s261
          %s263 = sshll.u32 [#allocation10], 4
          %s264 = int_to_ptr.vmem [resolvable:$true] %s263
          %269 = dma.hbm_to_vmem [thread:$0]  %s4, 512, %s264, [#allocation9], 128, 128, 8
        $region24: #{tpu_custom_call.1} parent=11 // pred_fallthru
          _
        // Predicated region
        $region25: #{tpu_custom_call.1} parent=11 // pred_check
          %p270 = pneg %p164
        $region26: #{tpu_custom_call.1} parent=11 // pred_check_branch
          %272 = sbr.rel (%p270) target = $region28
        $region27: #{tpu_custom_call.1} parent=11 // pred_region
          %s274 = ssub.s32 512, 512
          %275 = vsyncadd [#allocation12], %s274
          %s276 = sshll.u32 [#allocation11], 4
          %s277 = int_to_ptr.vmem [resolvable:$true] %s276
          %282 = dma.hbm_to_vmem [thread:$0]  %s5, 512, %s277, [#allocation12], 128, 128, 8
        $region28: #{tpu_custom_call.1} parent=11 // pred_fallthru
          _
      $region12: #{tpu_custom_call.1} parent=5 // pred_fallthru
        _
      %p283 = scmp.lt.s32.totalorder %s28, 2
      // Predicated region
      $region29: #{tpu_custom_call.1} parent=5 // pred_check
        %p284 = pneg %p283
      $region30: #{tpu_custom_call.1} parent=5 // pred_check_branch
        %286 = sbr.rel (%p284) target = $region32
      $region31: #{tpu_custom_call.1} parent=5 // pred_region
        // Predicated region
        $region33: #{tpu_custom_call.1} parent=31 // pred_check
          %p287 = pneg %p48
        $region34: #{tpu_custom_call.1} parent=31 // pred_check_branch
          %289 = sbr.rel (%p287) target = $region36
        $region35: #{tpu_custom_call.1} parent=31 // pred_region
          %s290 = sand.u32 %s38, 1
          %s291 = scalar_lea.sflag [#allocation3], %s290
          %s292 = sand.u32 %s38, 1
          %s293 = smul.addr %s292, 8
          %s294 = scalar_lea.vmem [#allocation2], %s293
          %s296 = ssub.s32 128, 128
          %297 = vsyncadd %s291, %s296
          %s298 = smul.addr %s28, 128
          %s299 = scalar_lea.hbm %s0, %s298
          %s301 = sshll.u32 %s294, 4
          %s302 = int_to_ptr.vmem [resolvable:$true] %s301
          %304 = dma.hbm_to_vmem [thread:$0]  %s299, 128, %s302, %s291
        $region36: #{tpu_custom_call.1} parent=31 // pred_fallthru
          _
        // Predicated region
        $region37: #{tpu_custom_call.1} parent=31 // pred_check
          %p305 = pneg %p74
        $region38: #{tpu_custom_call.1} parent=31 // pred_check_branch
          %307 = sbr.rel (%p305) target = $region40
        $region39: #{tpu_custom_call.1} parent=31 // pred_region
          %s308 = sand.u32 %s28, 1
          %s309 = scalar_lea.sflag [#allocation6], %s308
          %s310 = sand.u32 %s64, 1
          %s311 = smul.addr %s310, 8
          %s312 = scalar_lea.vmem [#allocation5], %s311
          %s314 = ssub.s32 128, 128
          %315 = vsyncadd %s309, %s314
          %s316 = smul.addr %s28, 128
          %s317 = scalar_lea.hbm %s1, %s316
          %s319 = sshll.u32 %s312, 4
          %s320 = int_to_ptr.vmem [resolvable:$true] %s319
          %322 = dma.hbm_to_vmem [thread:$0]  %s317, 128, %s320, %s309
        $region40: #{tpu_custom_call.1} parent=31 // pred_fallthru
          _
      $region32: #{tpu_custom_call.1} parent=5 // pred_fallthru
        _
      %p323 = scmp.le.s32.totalorder 1, %s28
      %p324 = scmp.lt.s32.totalorder %s28, 3
      %p325 = pnand %p323, %p324
      %p326 = pneg %p325
      // Predicated region
      $region41: #{tpu_custom_call.1} parent=5 // pred_check
        _
      $region42: #{tpu_custom_call.1} parent=5 // pred_check_branch
        %328 = sbr.rel (%p325) target = $region44
      $region43: #{tpu_custom_call.1} parent=5 // pred_region
        %s329 = ssub.s32 %s28, 1
        %s330 = sand.u32 %s41, 1
        %s331 = scalar_lea.sflag [#allocation3], %s330
        %s332 = sand.u32 %s41, 1
        %s333 = smul.addr %s332, 8
        %s334 = scalar_lea.vmem [#allocation2], %s333
        // Predicated region
        $region45: #{tpu_custom_call.1} parent=43 // pred_check
          %p335 = pneg %p54
        $region46: #{tpu_custom_call.1} parent=43 // pred_check_branch
          %337 = sbr.rel (%p335) target = $region48
        $region47: #{tpu_custom_call.1} parent=43 // pred_region
          %338 = dma.done %s331, 128
        $region48: #{tpu_custom_call.1} parent=43 // pred_fallthru
          _
        %s339 = sand.u32 %s33, 1
        %s340 = scalar_lea.sflag [#allocation6], %s339
        %s341 = sand.u32 %s67, 1
        %s342 = smul.addr %s341, 8
        %s343 = scalar_lea.vmem [#allocation5], %s342
        // Predicated region
        $region49: #{tpu_custom_call.1} parent=43 // pred_check
          %p344 = pneg %p80
        $region50: #{tpu_custom_call.1} parent=43 // pred_check_branch
          %346 = sbr.rel (%p344) target = $region52
        $region51: #{tpu_custom_call.1} parent=43 // pred_region
          %347 = dma.done %s340, 128
        $region52: #{tpu_custom_call.1} parent=43 // pred_fallthru
          _
        // Predicated region
        $region53: #{tpu_custom_call.1} parent=43 // pred_check
          %p348 = pneg %p101
        $region54: #{tpu_custom_call.1} parent=43 // pred_check_branch
          %350 = sbr.rel (%p348) target = $region56
        $region55: #{tpu_custom_call.1} parent=43 // pred_region
          %351 = dma.done [#allocation6], 512
        $region56: #{tpu_custom_call.1} parent=43 // pred_fallthru
          _
        // Predicated region
        $region57: #{tpu_custom_call.1} parent=43 // pred_check
          %p352 = pneg %p122
        $region58: #{tpu_custom_call.1} parent=43 // pred_check_branch
          %354 = sbr.rel (%p352) target = $region60
        $region59: #{tpu_custom_call.1} parent=43 // pred_region
          %355 = dma.done [#allocation9], 512
        $region60: #{tpu_custom_call.1} parent=43 // pred_fallthru
          _
        // Predicated region
        $region61: #{tpu_custom_call.1} parent=43 // pred_check
          %p356 = pneg %p143
        $region62: #{tpu_custom_call.1} parent=43 // pred_check_branch
          %358 = sbr.rel (%p356) target = $region64
        $region63: #{tpu_custom_call.1} parent=43 // pred_region
          %359 = dma.done [#allocation9], 512
        $region64: #{tpu_custom_call.1} parent=43 // pred_fallthru
          _
        // Predicated region
        $region65: #{tpu_custom_call.1} parent=43 // pred_check
          %p360 = pneg %p164
        $region66: #{tpu_custom_call.1} parent=43 // pred_check_branch
          %362 = sbr.rel (%p360) target = $region68
        $region67: #{tpu_custom_call.1} parent=43 // pred_region
          %363 = dma.done [#allocation12], 512
        $region68: #{tpu_custom_call.1} parent=43 // pred_fallthru
          _
        %s364 = sand.u32 %s41, 1
        %s365 = scalar_lea.sflag [#allocation3], %s364
        %s366 = sand.u32 %s41, 1
        %s367 = smul.addr %s366, 8
        %s368 = scalar_lea.vmem [#allocation2], %s367
        %p369 = pneg %p54
        %p370 = pneg %p51
        %s371 = sand.u32 %s33, 1
        %s372 = scalar_lea.sflag [#allocation6], %s371
        %s373 = sand.u32 %s67, 1
        %s374 = smul.addr %s373, 8
        %s375 = scalar_lea.vmem [#allocation5], %s374
        %p376 = pneg %p80
        %p377 = pneg %p77
        %p378 = pneg %p101
        %p379 = pneg %p98
        %p380 = pneg %p122
        %p381 = pneg %p119
        %p382 = pneg %p143
        %p383 = pneg %p140
        %p384 = pneg %p164
        %p385 = pneg %p161
        %p386 = pneg %p190
        %p387 = pneg %p187
        %s388 = sand.u32 %s177, 1
        %s389 = scalar_lea.sflag [#allocation4], %s388
        %s390 = sand.u32 %s177, 1
        %s391 = smul.addr %s390, 8
        %s392 = scalar_lea.vmem [#allocation13], %s391
        %p393 = pneg %p216
        %p394 = pneg %p213
        %s395 = sand.u32 %s203, 1
        %s396 = scalar_lea.sflag [#allocation15], %s395
        %s397 = sand.u32 %s203, 1
        %s398 = smul.addr %s397, 32
        %s399 = scalar_lea.vmem [#allocation14], %s398
        %v400 = vld [vmem:[%s334] sm:$0xff]
        %v401 = vld [vmem:[%s343] sm:$0xff]
        %v402 = vld [vmem:[#allocation7] sm:$0xff]
        %v403 = vld [vmem:[#allocation7 + $0x8] sm:$0xff]
        %v404 = vld [vmem:[#allocation7 + $0x10] sm:$0xff]
        %v405 = vld [vmem:[#allocation7 + $0x18] sm:$0xff]
        %vm406 = vcmask 261120
        %v408 = vsel %vm406, %v400, 0
        %410 = vmatprep.subr.mxu0 0.0
        %411 = vmatpush1.msra.mxu0 %v402
        %412 = vmatprep.subr.mxu0 0.0
        %413 = vmatpush1.msra.mxu0 %v403
        %414 = vmatprep.subr.mxu0 0.0
        %415 = vmatpush1.msra.mxu0 %v404
        %416 = vmatprep.subr.mxu0 0.0
        %417 = vmatpush1.msra.mxu0 %v405
        %418 = vmatprep.subr.mxu0 0.0
        %419 = vmatpush1.msra.mxu0 0.0
        %420 = vmatprep.subr.mxu0 0.0
        %421 = vmatpush1.msra.mxu0 0.0
        %422 = vmatprep.subr.mxu0 0.0
        %423 = vmatpush1.msra.mxu0 0.0
        %424 = vmatprep.subr.mxu0 0.0
        %425 = vmatpush1.msra.mxu0 0.0
        %426 = vmatprep.subr.mxu0 0.0
        %427 = vmatpush1.msra.mxu0 0.0
        %428 = vmatprep.subr.mxu0 0.0
        %429 = vmatpush1.msra.mxu0 0.0
        %430 = vmatprep.subr.mxu0 0.0
        %431 = vmatpush1.msra.mxu0 0.0
        %432 = vmatprep.subr.mxu0 0.0
        %433 = vmatpush1.msra.mxu0 0.0
        %434 = vmatprep.subr.mxu0 0.0
        %435 = vmatpush1.msra.mxu0 0.0
        %436 = vmatprep.subr.mxu0 0.0
        %437 = vmatpush1.msra.mxu0 0.0
        %438 = vmatprep.subr.mxu0 0.0
        %439 = vmatpush1.msra.mxu0 0.0
        %440 = vmatprep.subr.mxu0 0.0
        %441 = vmatpush1.msra.mxu0 0.0
        %442 = vmatprep.subr.mxu0 0.0
        %443 = vmatpush1.msra.mxu0 0.0
        %444 = vmatprep.subr.mxu0 0.0
        %445 = vmatpush1.msra.mxu0 0.0
        %446 = vmatprep.subr.mxu0 0.0
        %447 = vmatpush1.msra.mxu0 0.0
        %448 = vmatprep.subr.mxu0 0.0
        %449 = vmatpush1.msra.mxu0 0.0
        %450 = vmatprep.subr.mxu0 0.0
        %451 = vmatpush1.msra.mxu0 0.0
        %452 = vmatprep.subr.mxu0 0.0
        %453 = vmatpush1.msra.mxu0 0.0
        %454 = vmatprep.subr.mxu0 0.0
        %455 = vmatpush1.msra.mxu0 0.0
        %456 = vmatprep.subr.mxu0 0.0
        %457 = vmatpush1.msra.mxu0 0.0
        %458 = vmatprep.subr.mxu0 0.0
        %459 = vmatpush1.msra.mxu0 0.0
        %460 = vmatprep.subr.mxu0 0.0
        %461 = vmatpush1.msra.mxu0 0.0
        %462 = vmatprep.subr.mxu0 0.0
        %463 = vmatpush1.msra.mxu0 0.0
        %464 = vmatprep.subr.mxu0 0.0
        %465 = vmatpush1.msra.mxu0 0.0
        %466 = vmatprep.subr.mxu0 0.0
        %467 = vmatpush1.msra.mxu0 0.0
        %468 = vmatprep.subr.mxu0 0.0
        %469 = vmatpush1.msra.mxu0 0.0
        %470 = vmatprep.subr.mxu0 0.0
        %471 = vmatpush1.msra.mxu0 0.0
        %472 = vmatprep.subr.mxu0 0.0
        %473 = vmatpush1.msra.mxu0 0.0
        %474 = vmatprep.mubr.f32.mxu0 0.0
        %475 = vmatmul.mubr.f32.gmra.mrb[0].mxu0 %v408
        %v476 = vpop.f32.mrb[0].mxu0
        %v477 = vadd.f32 0.0, %v476
        %v478 = vpop.f32.mrb[0].mxu0
        %479 = vdwg.mxu0
        %v480 = vld [vmem:[#allocation8] sm:$0xff]
        %v481 = vld [vmem:[#allocation8 + $0x8] sm:$0xff]
        %v482 = vld [vmem:[#allocation8 + $0x10] sm:$0xff]
        %v483 = vld [vmem:[#allocation8 + $0x18] sm:$0xff]
        %v485 = vsel %vm406, %v401, 0
        %487 = vmatprep.subr.mxu0 0.0
        %488 = vmatpush1.msra.mxu0 %v480
        %489 = vmatprep.subr.mxu0 0.0
        %490 = vmatpush1.msra.mxu0 %v481
        %491 = vmatprep.subr.mxu0 0.0
        %492 = vmatpush1.msra.mxu0 %v482
        %493 = vmatprep.subr.mxu0 0.0
        %494 = vmatpush1.msra.mxu0 %v483
        %495 = vmatprep.subr.mxu0 0.0
        %496 = vmatpush1.msra.mxu0 0.0
        %497 = vmatprep.subr.mxu0 0.0
        %498 = vmatpush1.msra.mxu0 0.0
        %499 = vmatprep.subr.mxu0 0.0
        %500 = vmatpush1.msra.mxu0 0.0
        %501 = vmatprep.subr.mxu0 0.0
        %502 = vmatpush1.msra.mxu0 0.0
        %503 = vmatprep.subr.mxu0 0.0
        %504 = vmatpush1.msra.mxu0 0.0
        %505 = vmatprep.subr.mxu0 0.0
        %506 = vmatpush1.msra.mxu0 0.0
        %507 = vmatprep.subr.mxu0 0.0
        %508 = vmatpush1.msra.mxu0 0.0
        %509 = vmatprep.subr.mxu0 0.0
        %510 = vmatpush1.msra.mxu0 0.0
        %511 = vmatprep.subr.mxu0 0.0
        %512 = vmatpush1.msra.mxu0 0.0
        %513 = vmatprep.subr.mxu0 0.0
        %514 = vmatpush1.msra.mxu0 0.0
        %515 = vmatprep.subr.mxu0 0.0
        %516 = vmatpush1.msra.mxu0 0.0
        %517 = vmatprep.subr.mxu0 0.0
        %518 = vmatpush1.msra.mxu0 0.0
        %519 = vmatprep.subr.mxu0 0.0
        %520 = vmatpush1.msra.mxu0 0.0
        %521 = vmatprep.subr.mxu0 0.0
        %522 = vmatpush1.msra.mxu0 0.0
        %523 = vmatprep.subr.mxu0 0.0
        %524 = vmatpush1.msra.mxu0 0.0
        %525 = vmatprep.subr.mxu0 0.0
        %526 = vmatpush1.msra.mxu0 0.0
        %527 = vmatprep.subr.mxu0 0.0
        %528 = vmatpush1.msra.mxu0 0.0
        %529 = vmatprep.subr.mxu0 0.0
        %530 = vmatpush1.msra.mxu0 0.0
        %531 = vmatprep.subr.mxu0 0.0
        %532 = vmatpush1.msra.mxu0 0.0
        %533 = vmatprep.subr.mxu0 0.0
        %534 = vmatpush1.msra.mxu0 0.0
        %535 = vmatprep.subr.mxu0 0.0
        %536 = vmatpush1.msra.mxu0 0.0
        %537 = vmatprep.subr.mxu0 0.0
        %538 = vmatpush1.msra.mxu0 0.0
        %539 = vmatprep.subr.mxu0 0.0
        %540 = vmatpush1.msra.mxu0 0.0
        %541 = vmatprep.subr.mxu0 0.0
        %542 = vmatpush1.msra.mxu0 0.0
        %543 = vmatprep.subr.mxu0 0.0
        %544 = vmatpush1.msra.mxu0 0.0
        %545 = vmatprep.subr.mxu0 0.0
        %546 = vmatpush1.msra.mxu0 0.0
        %547 = vmatprep.subr.mxu0 0.0
        %548 = vmatpush1.msra.mxu0 0.0
        %549 = vmatprep.subr.mxu0 0.0
        %550 = vmatpush1.msra.mxu0 0.0
        %551 = vmatprep.mubr.f32.mxu0 0.0
        %552 = vmatmul.mubr.f32.gmra.mrb[0].mxu0 %v485
        %v553 = vpop.f32.mrb[0].mxu0
        %v554 = vadd.f32 0.0, %v553
        %v555 = vpop.f32.mrb[0].mxu0
        %556 = vdwg.mxu0
        %v557 = vld [vmem:[#allocation10] sm:$0xff]
        %v558 = vld [vmem:[#allocation10 + $0x8] sm:$0xff]
        %v559 = vld [vmem:[#allocation10 + $0x10] sm:$0xff]
        %v560 = vld [vmem:[#allocation10 + $0x18] sm:$0xff]
        %561 = vmatprep.subr.mxu0 0.0
        %562 = vmatpush1.msra.mxu0 %v557
        %563 = vmatprep.subr.mxu0 0.0
        %564 = vmatpush1.msra.mxu0 %v558
        %565 = vmatprep.subr.mxu0 0.0
        %566 = vmatpush1.msra.mxu0 %v559
        %567 = vmatprep.subr.mxu0 0.0
        %568 = vmatpush1.msra.mxu0 %v560
        %569 = vmatprep.subr.mxu0 0.0
        %570 = vmatpush1.msra.mxu0 0.0
        %571 = vmatprep.subr.mxu0 0.0
        %572 = vmatpush1.msra.mxu0 0.0
        %573 = vmatprep.subr.mxu0 0.0
        %574 = vmatpush1.msra.mxu0 0.0
        %575 = vmatprep.subr.mxu0 0.0
        %576 = vmatpush1.msra.mxu0 0.0
        %577 = vmatprep.subr.mxu0 0.0
        %578 = vmatpush1.msra.mxu0 0.0
        %579 = vmatprep.subr.mxu0 0.0
        %580 = vmatpush1.msra.mxu0 0.0
        %581 = vmatprep.subr.mxu0 0.0
        %582 = vmatpush1.msra.mxu0 0.0
        %583 = vmatprep.subr.mxu0 0.0
        %584 = vmatpush1.msra.mxu0 0.0
        %585 = vmatprep.subr.mxu0 0.0
        %586 = vmatpush1.msra.mxu0 0.0
        %587 = vmatprep.subr.mxu0 0.0
        %588 = vmatpush1.msra.mxu0 0.0
        %589 = vmatprep.subr.mxu0 0.0
        %590 = vmatpush1.msra.mxu0 0.0
        %591 = vmatprep.subr.mxu0 0.0
        %592 = vmatpush1.msra.mxu0 0.0
        %593 = vmatprep.subr.mxu0 0.0
        %594 = vmatpush1.msra.mxu0 0.0
        %595 = vmatprep.subr.mxu0 0.0
        %596 = vmatpush1.msra.mxu0 0.0
        %597 = vmatprep.subr.mxu0 0.0
        %598 = vmatpush1.msra.mxu0 0.0
        %599 = vmatprep.subr.mxu0 0.0
        %600 = vmatpush1.msra.mxu0 0.0
        %601 = vmatprep.subr.mxu0 0.0
        %602 = vmatpush1.msra.mxu0 0.0
        %603 = vmatprep.subr.mxu0 0.0
        %604 = vmatpush1.msra.mxu0 0.0
        %605 = vmatprep.subr.mxu0 0.0
        %606 = vmatpush1.msra.mxu0 0.0
        %607 = vmatprep.subr.mxu0 0.0
        %608 = vmatpush1.msra.mxu0 0.0
        %609 = vmatprep.subr.mxu0 0.0
        %610 = vmatpush1.msra.mxu0 0.0
        %611 = vmatprep.subr.mxu0 0.0
        %612 = vmatpush1.msra.mxu0 0.0
        %613 = vmatprep.subr.mxu0 0.0
        %614 = vmatpush1.msra.mxu0 0.0
        %615 = vmatprep.subr.mxu0 0.0
        %616 = vmatpush1.msra.mxu0 0.0
        %617 = vmatprep.subr.mxu0 0.0
        %618 = vmatpush1.msra.mxu0 0.0
        %619 = vmatprep.subr.mxu0 0.0
        %620 = vmatpush1.msra.mxu0 0.0
        %621 = vmatprep.subr.mxu0 0.0
        %622 = vmatpush1.msra.mxu0 0.0
        %623 = vmatprep.subr.mxu0 0.0
        %624 = vmatpush1.msra.mxu0 0.0
        %625 = vmatprep.mubr.f32.mxu0 0.0
        %626 = vmatmul.mubr.f32.gmra.mrb[0].mxu0 %v485
        %v627 = vpop.f32.mrb[0].mxu0
        %v628 = vadd.f32 0.0, %v627
        %v629 = vpop.f32.mrb[0].mxu0
        %630 = vdwg.mxu0
        %vm631 = vcmask 64512
        %v633 = vsel %vm631, %v477, 0
        %v636 = vsel %vm631, %v554, 0
        %638 = vmatprep.subr.mxu0 0.0
        %639 = vmatpush1.xpose.msra.mxu0 %v636
        %640 = vmatprep.subr.mxu0 0.0
        %641 = vmatpush1.xpose.msra.mxu0 0.0
        %642 = vmatprep.subr.mxu0 0.0
        %643 = vmatpush1.xpose.msra.mxu0 0.0
        %644 = vmatprep.subr.mxu0 0.0
        %645 = vmatpush1.xpose.msra.mxu0 0.0
        %646 = vmatprep.subr.mxu0 0.0
        %647 = vmatpush1.xpose.msra.mxu0 0.0
        %648 = vmatprep.subr.mxu0 0.0
        %649 = vmatpush1.xpose.msra.mxu0 0.0
        %650 = vmatprep.subr.mxu0 0.0
        %651 = vmatpush1.xpose.msra.mxu0 0.0
        %652 = vmatprep.subr.mxu0 0.0
        %653 = vmatpush1.xpose.msra.mxu0 0.0
        %654 = vmatprep.subr.mxu0 0.0
        %655 = vmatpush1.xpose.msra.mxu0 0.0
        %656 = vmatprep.subr.mxu0 0.0
        %657 = vmatpush1.xpose.msra.mxu0 0.0
        %658 = vmatprep.subr.mxu0 0.0
        %659 = vmatpush1.xpose.msra.mxu0 0.0
        %660 = vmatprep.subr.mxu0 0.0
        %661 = vmatpush1.xpose.msra.mxu0 0.0
        %662 = vmatprep.subr.mxu0 0.0
        %663 = vmatpush1.xpose.msra.mxu0 0.0
        %664 = vmatprep.subr.mxu0 0.0
        %665 = vmatpush1.xpose.msra.mxu0 0.0
        %666 = vmatprep.subr.mxu0 0.0
        %667 = vmatpush1.xpose.msra.mxu0 0.0
        %668 = vmatprep.subr.mxu0 0.0
        %669 = vmatpush1.xpose.msra.mxu0 0.0
        %670 = vmatprep.subr.mxu0 0.0
        %671 = vmatpush1.xpose.msra.mxu0 0.0
        %672 = vmatprep.subr.mxu0 0.0
        %673 = vmatpush1.xpose.msra.mxu0 0.0
        %674 = vmatprep.subr.mxu0 0.0
        %675 = vmatpush1.xpose.msra.mxu0 0.0
        %676 = vmatprep.subr.mxu0 0.0
        %677 = vmatpush1.xpose.msra.mxu0 0.0
        %678 = vmatprep.subr.mxu0 0.0
        %679 = vmatpush1.xpose.msra.mxu0 0.0
        %680 = vmatprep.subr.mxu0 0.0
        %681 = vmatpush1.xpose.msra.mxu0 0.0
        %682 = vmatprep.subr.mxu0 0.0
        %683 = vmatpush1.xpose.msra.mxu0 0.0
        %684 = vmatprep.subr.mxu0 0.0
        %685 = vmatpush1.xpose.msra.mxu0 0.0
        %686 = vmatprep.subr.mxu0 0.0
        %687 = vmatpush1.xpose.msra.mxu0 0.0
        %688 = vmatprep.subr.mxu0 0.0
        %689 = vmatpush1.xpose.msra.mxu0 0.0
        %690 = vmatprep.subr.mxu0 0.0
        %691 = vmatpush1.xpose.msra.mxu0 0.0
        %692 = vmatprep.subr.mxu0 0.0
        %693 = vmatpush1.xpose.msra.mxu0 0.0
        %694 = vmatprep.subr.mxu0 0.0
        %695 = vmatpush1.xpose.msra.mxu0 0.0
        %696 = vmatprep.subr.mxu0 0.0
        %697 = vmatpush1.xpose.msra.mxu0 0.0
        %698 = vmatprep.subr.mxu0 0.0
        %699 = vmatpush1.xpose.msra.mxu0 0.0
        %700 = vmatprep.subr.mxu0 0.0
        %701 = vmatpush1.xpose.msra.mxu0 0.0
        %702 = vmatprep.mubr.f32.mxu0 0.0
        %703 = vmatmul.mubr.f32.gmra.mrb[0].mxu0 %v633
        %v704 = vpop.f32.mrb[0].mxu0
        %v705 = vadd.f32 0.0, %v704
        %v706 = vpop.f32.mrb[0].mxu0
        %707 = vdwg.mxu0
        %v708 = vmul.f32 %v705, 0.35355338
        %v709 = vsel %vm631, %v708, -inf
        %710 = vmax.xlane.f32.xlu0 %v709
        %v711 = vpop.xlane.xlu0 %710
        %v712 = vsub.f32 %v708, %v711
        %v713 = vmul.f32 %v712, 1.442695
        %v714 = vpow.pop %v713
        %v715 = vsel %vm631, %v714, 0.0
        %716 = vadd.xlane.f32.xlu0 %v715
        %v717 = vpop.xlane.xlu0 %716
        %v718 = vrcp.pop %v717
        %v719 = vmul.f32 %v714, %v718
        %720 = vst.msk [vmem:[%s399] sm:$0xff] %vm631, %v719
        %v722 = vsel %vm631, %v719, 0
        %724 = vmatprep.subr.mxu0 0.0
        %725 = vmatpush1.msra.mxu0 %v628
        %726 = vmatprep.subr.mxu0 0.0
        %727 = vmatpush1.msra.mxu0 0.0
        %728 = vmatprep.subr.mxu0 0.0
        %729 = vmatpush1.msra.mxu0 0.0
        %730 = vmatprep.subr.mxu0 0.0
        %731 = vmatpush1.msra.mxu0 0.0
        %732 = vmatprep.subr.mxu0 0.0
        %733 = vmatpush1.msra.mxu0 0.0
        %734 = vmatprep.subr.mxu0 0.0
        %735 = vmatpush1.msra.mxu0 0.0
        %736 = vmatprep.subr.mxu0 0.0
        %737 = vmatpush1.msra.mxu0 0.0
        %738 = vmatprep.subr.mxu0 0.0
        %739 = vmatpush1.msra.mxu0 0.0
        %740 = vmatprep.subr.mxu0 0.0
        %741 = vmatpush1.msra.mxu0 0.0
        %742 = vmatprep.subr.mxu0 0.0
        %743 = vmatpush1.msra.mxu0 0.0
        %744 = vmatprep.subr.mxu0 0.0
        %745 = vmatpush1.msra.mxu0 0.0
        %746 = vmatprep.subr.mxu0 0.0
        %747 = vmatpush1.msra.mxu0 0.0
        %748 = vmatprep.subr.mxu0 0.0
        %749 = vmatpush1.msra.mxu0 0.0
        %750 = vmatprep.subr.mxu0 0.0
        %751 = vmatpush1.msra.mxu0 0.0
        %752 = vmatprep.subr.mxu0 0.0
        %753 = vmatpush1.msra.mxu0 0.0
        %754 = vmatprep.subr.mxu0 0.0
        %755 = vmatpush1.msra.mxu0 0.0
        %756 = vmatprep.subr.mxu0 0.0
        %757 = vmatpush1.msra.mxu0 0.0
        %758 = vmatprep.subr.mxu0 0.0
        %759 = vmatpush1.msra.mxu0 0.0
        %760 = vmatprep.subr.mxu0 0.0
        %761 = vmatpush1.msra.mxu0 0.0
        %762 = vmatprep.subr.mxu0 0.0
        %763 = vmatpush1.msra.mxu0 0.0
        %764 = vmatprep.subr.mxu0 0.0
        %765 = vmatpush1.msra.mxu0 0.0
        %766 = vmatprep.subr.mxu0 0.0
        %767 = vmatpush1.msra.mxu0 0.0
        %768 = vmatprep.subr.mxu0 0.0
        %769 = vmatpush1.msra.mxu0 0.0
        %770 = vmatprep.subr.mxu0 0.0
        %771 = vmatpush1.msra.mxu0 0.0
        %772 = vmatprep.subr.mxu0 0.0
        %773 = vmatpush1.msra.mxu0 0.0
        %774 = vmatprep.subr.mxu0 0.0
        %775 = vmatpush1.msra.mxu0 0.0
        %776 = vmatprep.subr.mxu0 0.0
        %777 = vmatpush1.msra.mxu0 0.0
        %778 = vmatprep.subr.mxu0 0.0
        %779 = vmatpush1.msra.mxu0 0.0
        %780 = vmatprep.subr.mxu0 0.0
        %781 = vmatpush1.msra.mxu0 0.0
        %782 = vmatprep.subr.mxu0 0.0
        %783 = vmatpush1.msra.mxu0 0.0
        %784 = vmatprep.subr.mxu0 0.0
        %785 = vmatpush1.msra.mxu0 0.0
        %786 = vmatprep.subr.mxu0 0.0
        %787 = vmatpush1.msra.mxu0 0.0
        %788 = vmatprep.mubr.f32.mxu0 0.0
        %789 = vmatmul.mubr.f32.gmra.mrb[0].mxu0 %v722
        %v790 = vpop.f32.mrb[0].mxu0
        %v791 = vadd.f32 0.0, %v790
        %v792 = vpop.f32.mrb[0].mxu0
        %793 = vdwg.mxu0
        %v794 = vld [vmem:[#allocation11] sm:$0xff]
        %795 = vrot.lane.b32.xlu0 %v477, 120
        %v796 = vpop.permute.xlu0 %795
        %797 = vrot.lane.b32.xlu0 %v554, 120
        %v798 = vpop.permute.xlu0 %797
        %v799 = vsel %vm631, %v796, 0
        %v801 = vsel %vm631, %v798, 0
        %803 = vmatprep.subr.mxu0 0.0
        %804 = vmatpush1.xpose.msra.mxu0 %v801
        %805 = vmatprep.subr.mxu0 0.0
        %806 = vmatpush1.xpose.msra.mxu0 0.0
        %807 = vmatprep.subr.mxu0 0.0
        %808 = vmatpush1.xpose.msra.mxu0 0.0
        %809 = vmatprep.subr.mxu0 0.0
        %810 = vmatpush1.xpose.msra.mxu0 0.0
        %811 = vmatprep.subr.mxu0 0.0
        %812 = vmatpush1.xpose.msra.mxu0 0.0
        %813 = vmatprep.subr.mxu0 0.0
        %814 = vmatpush1.xpose.msra.mxu0 0.0
        %815 = vmatprep.subr.mxu0 0.0
        %816 = vmatpush1.xpose.msra.mxu0 0.0
        %817 = vmatprep.subr.mxu0 0.0
        %818 = vmatpush1.xpose.msra.mxu0 0.0
        %819 = vmatprep.subr.mxu0 0.0
        %820 = vmatpush1.xpose.msra.mxu0 0.0
        %821 = vmatprep.subr.mxu0 0.0
        %822 = vmatpush1.xpose.msra.mxu0 0.0
        %823 = vmatprep.subr.mxu0 0.0
        %824 = vmatpush1.xpose.msra.mxu0 0.0
        %825 = vmatprep.subr.mxu0 0.0
        %826 = vmatpush1.xpose.msra.mxu0 0.0
        %827 = vmatprep.subr.mxu0 0.0
        %828 = vmatpush1.xpose.msra.mxu0 0.0
        %829 = vmatprep.subr.mxu0 0.0
        %830 = vmatpush1.xpose.msra.mxu0 0.0
        %831 = vmatprep.subr.mxu0 0.0
        %832 = vmatpush1.xpose.msra.mxu0 0.0
        %833 = vmatprep.subr.mxu0 0.0
        %834 = vmatpush1.xpose.msra.mxu0 0.0
        %835 = vmatprep.subr.mxu0 0.0
        %836 = vmatpush1.xpose.msra.mxu0 0.0
        %837 = vmatprep.subr.mxu0 0.0
        %838 = vmatpush1.xpose.msra.mxu0 0.0
        %839 = vmatprep.subr.mxu0 0.0
        %840 = vmatpush1.xpose.msra.mxu0 0.0
        %841 = vmatprep.subr.mxu0 0.0
        %842 = vmatpush1.xpose.msra.mxu0 0.0
        %843 = vmatprep.subr.mxu0 0.0
        %844 = vmatpush1.xpose.msra.mxu0 0.0
        %845 = vmatprep.subr.mxu0 0.0
        %846 = vmatpush1.xpose.msra.mxu0 0.0
        %847 = vmatprep.subr.mxu0 0.0
        %848 = vmatpush1.xpose.msra.mxu0 0.0
        %849 = vmatprep.subr.mxu0 0.0
        %850 = vmatpush1.xpose.msra.mxu0 0.0
        %851 = vmatprep.subr.mxu0 0.0
        %852 = vmatpush1.xpose.msra.mxu0 0.0
        %853 = vmatprep.subr.mxu0 0.0
        %854 = vmatpush1.xpose.msra.mxu0 0.0
        %855 = vmatprep.subr.mxu0 0.0
        %856 = vmatpush1.xpose.msra.mxu0 0.0
        %857 = vmatprep.subr.mxu0 0.0
        %858 = vmatpush1.xpose.msra.mxu0 0.0
        %859 = vmatprep.subr.mxu0 0.0
        %860 = vmatpush1.xpose.msra.mxu0 0.0
        %861 = vmatprep.subr.mxu0 0.0
        %862 = vmatpush1.xpose.msra.mxu0 0.0
        %863 = vmatprep.subr.mxu0 0.0
        %864 = vmatpush1.xpose.msra.mxu0 0.0
        %865 = vmatprep.subr.mxu0 0.0
        %866 = vmatpush1.xpose.msra.mxu0 0.0
        %867 = vmatprep.mubr.f32.mxu0 0.0
        %868 = vmatmul.mubr.f32.gmra.mrb[0].mxu0 %v799
        %v869 = vpop.f32.mrb[0].mxu0
        %v870 = vadd.f32 0.0, %v869
        %v871 = vpop.f32.mrb[0].mxu0
        %872 = vdwg.mxu0
        %v873 = vmul.f32 %v870, 0.35355338
        %v874 = vsel %vm631, %v873, -inf
        %875 = vmax.xlane.f32.xlu0 %v874
        %v876 = vpop.xlane.xlu0 %875
        %v877 = vsub.f32 %v873, %v876
        %v878 = vmul.f32 %v877, 1.442695
        %v879 = vpow.pop %v878
        %v880 = vsel %vm631, %v879, 0.0
        %881 = vadd.xlane.f32.xlu0 %v880
        %v882 = vpop.xlane.xlu0 %881
        %v883 = vrcp.pop %v882
        %v884 = vmul.f32 %v879, %v883
        %s885 = scalar_lea.vmem %s399, 8 [#allocation14]
        %886 = vst.msk [vmem:[%s885] sm:$0xff] %vm631, %v884
        %888 = vrot.lane.b32.xlu0 %v628, 120
        %v889 = vpop.permute.xlu0 %888
        %v892 = vsel %vm631, %v884, 0
        %894 = vmatprep.subr.mxu0 0.0
        %895 = vmatpush1.msra.mxu0 %v889
        %896 = vmatprep.subr.mxu0 0.0
        %897 = vmatpush1.msra.mxu0 0.0
        %898 = vmatprep.subr.mxu0 0.0
        %899 = vmatpush1.msra.mxu0 0.0
        %900 = vmatprep.subr.mxu0 0.0
        %901 = vmatpush1.msra.mxu0 0.0
        %902 = vmatprep.subr.mxu0 0.0
        %903 = vmatpush1.msra.mxu0 0.0
        %904 = vmatprep.subr.mxu0 0.0
        %905 = vmatpush1.msra.mxu0 0.0
        %906 = vmatprep.subr.mxu0 0.0
        %907 = vmatpush1.msra.mxu0 0.0
        %908 = vmatprep.subr.mxu0 0.0
        %909 = vmatpush1.msra.mxu0 0.0
        %910 = vmatprep.subr.mxu0 0.0
        %911 = vmatpush1.msra.mxu0 0.0
        %912 = vmatprep.subr.mxu0 0.0
        %913 = vmatpush1.msra.mxu0 0.0
        %914 = vmatprep.subr.mxu0 0.0
        %915 = vmatpush1.msra.mxu0 0.0
        %916 = vmatprep.subr.mxu0 0.0
        %917 = vmatpush1.msra.mxu0 0.0
        %918 = vmatprep.subr.mxu0 0.0
        %919 = vmatpush1.msra.mxu0 0.0
        %920 = vmatprep.subr.mxu0 0.0
        %921 = vmatpush1.msra.mxu0 0.0
        %922 = vmatprep.subr.mxu0 0.0
        %923 = vmatpush1.msra.mxu0 0.0
        %924 = vmatprep.subr.mxu0 0.0
        %925 = vmatpush1.msra.mxu0 0.0
        %926 = vmatprep.subr.mxu0 0.0
        %927 = vmatpush1.msra.mxu0 0.0
        %928 = vmatprep.subr.mxu0 0.0
        %929 = vmatpush1.msra.mxu0 0.0
        %930 = vmatprep.subr.mxu0 0.0
        %931 = vmatpush1.msra.mxu0 0.0
        %932 = vmatprep.subr.mxu0 0.0
        %933 = vmatpush1.msra.mxu0 0.0
        %934 = vmatprep.subr.mxu0 0.0
        %935 = vmatpush1.msra.mxu0 0.0
        %936 = vmatprep.subr.mxu0 0.0
        %937 = vmatpush1.msra.mxu0 0.0
        %938 = vmatprep.subr.mxu0 0.0
        %939 = vmatpush1.msra.mxu0 0.0
        %940 = vmatprep.subr.mxu0 0.0
        %941 = vmatpush1.msra.mxu0 0.0
        %942 = vmatprep.subr.mxu0 0.0
        %943 = vmatpush1.msra.mxu0 0.0
        %944 = vmatprep.subr.mxu0 0.0
        %945 = vmatpush1.msra.mxu0 0.0
        %946 = vmatprep.subr.mxu0 0.0
        %947 = vmatpush1.msra.mxu0 0.0
        %948 = vmatprep.subr.mxu0 0.0
        %949 = vmatpush1.msra.mxu0 0.0
        %950 = vmatprep.subr.mxu0 0.0
        %951 = vmatpush1.msra.mxu0 0.0
        %952 = vmatprep.subr.mxu0 0.0
        %953 = vmatpush1.msra.mxu0 0.0
        %954 = vmatprep.subr.mxu0 0.0
        %955 = vmatpush1.msra.mxu0 0.0
        %956 = vmatprep.subr.mxu0 0.0
        %957 = vmatpush1.msra.mxu0 0.0
        %958 = vmatprep.mubr.f32.mxu0 0.0
        %959 = vmatmul.mubr.f32.gmra.mrb[0].mxu0 %v892
        %v960 = vpop.f32.mrb[0].mxu0
        %v961 = vadd.f32 0.0, %v960
        %v962 = vpop.f32.mrb[0].mxu0
        %963 = vdwg.mxu0
        %v964 = vld [vmem:[#allocation11 + $0x8] sm:$0xff]
        %v966 = vsel %vm631, %v961, 0
        %968 = vmatprep.subr.mxu0 0.0
        %969 = vmatpush1.msra.mxu0 %v964
        %970 = vmatprep.subr.mxu0 0.0
        %971 = vmatpush1.msra.mxu0 0.0
        %972 = vmatprep.subr.mxu0 0.0
        %973 = vmatpush1.msra.mxu0 0.0
        %974 = vmatprep.subr.mxu0 0.0
        %975 = vmatpush1.msra.mxu0 0.0
        %976 = vmatprep.subr.mxu0 0.0
        %977 = vmatpush1.msra.mxu0 0.0
        %978 = vmatprep.subr.mxu0 0.0
        %979 = vmatpush1.msra.mxu0 0.0
        %980 = vmatprep.subr.mxu0 0.0
        %981 = vmatpush1.msra.mxu0 0.0
        %982 = vmatprep.subr.mxu0 0.0
        %983 = vmatpush1.msra.mxu0 0.0
        %984 = vmatprep.subr.mxu0 0.0
        %985 = vmatpush1.msra.mxu0 0.0
        %986 = vmatprep.subr.mxu0 0.0
        %987 = vmatpush1.msra.mxu0 0.0
        %988 = vmatprep.subr.mxu0 0.0
        %989 = vmatpush1.msra.mxu0 0.0
        %990 = vmatprep.subr.mxu0 0.0
        %991 = vmatpush1.msra.mxu0 0.0
        %992 = vmatprep.subr.mxu0 0.0
        %993 = vmatpush1.msra.mxu0 0.0
        %994 = vmatprep.subr.mxu0 0.0
        %995 = vmatpush1.msra.mxu0 0.0
        %996 = vmatprep.subr.mxu0 0.0
        %997 = vmatpush1.msra.mxu0 0.0
        %998 = vmatprep.subr.mxu0 0.0
        %999 = vmatpush1.msra.mxu0 0.0
        %1000 = vmatprep.subr.mxu0 0.0
        %1001 = vmatpush1.msra.mxu0 0.0
        %1002 = vmatprep.subr.mxu0 0.0
        %1003 = vmatpush1.msra.mxu0 0.0
        %1004 = vmatprep.subr.mxu0 0.0
        %1005 = vmatpush1.msra.mxu0 0.0
        %1006 = vmatprep.subr.mxu0 0.0
        %1007 = vmatpush1.msra.mxu0 0.0
        %1008 = vmatprep.subr.mxu0 0.0
        %1009 = vmatpush1.msra.mxu0 0.0
        %1010 = vmatprep.subr.mxu0 0.0
        %1011 = vmatpush1.msra.mxu0 0.0
        %1012 = vmatprep.subr.mxu0 0.0
        %1013 = vmatpush1.msra.mxu0 0.0
        %1014 = vmatprep.subr.mxu0 0.0
        %1015 = vmatpush1.msra.mxu0 0.0
        %1016 = vmatprep.subr.mxu0 0.0
        %1017 = vmatpush1.msra.mxu0 0.0
        %1018 = vmatprep.subr.mxu0 0.0
        %1019 = vmatpush1.msra.mxu0 0.0
        %1020 = vmatprep.subr.mxu0 0.0
        %1021 = vmatpush1.msra.mxu0 0.0
        %1022 = vmatprep.subr.mxu0 0.0
        %1023 = vmatpush1.msra.mxu0 0.0
        %1024 = vmatprep.subr.mxu0 0.0
        %1025 = vmatpush1.msra.mxu0 0.0
        %1026 = vmatprep.subr.mxu0 0.0
        %1027 = vmatpush1.msra.mxu0 0.0
        %1028 = vmatprep.subr.mxu0 0.0
        %1029 = vmatpush1.msra.mxu0 0.0
        %1030 = vmatprep.subr.mxu0 0.0
        %1031 = vmatpush1.msra.mxu0 0.0
        %1032 = vmatprep.mubr.f32.mxu0 0.0
        %1033 = vmatmul.mubr.f32.gmra.mrb[0].mxu0 %v966
        %v1034 = vpop.f32.mrb[0].mxu0
        %v1035 = vadd.f32 0.0, %v1034
        %v1036 = vpop.f32.mrb[0].mxu0
        %1037 = vdwg.mxu0
        %v1039 = vsel %vm631, %v791, 0
        %1041 = vmatprep.subr.mxu0 0.0
        %1042 = vmatpush1.msra.mxu0 %v794
        %1043 = vmatprep.subr.mxu0 0.0
        %1044 = vmatpush1.msra.mxu0 0.0
        %1045 = vmatprep.subr.mxu0 0.0
        %1046 = vmatpush1.msra.mxu0 0.0
        %1047 = vmatprep.subr.mxu0 0.0
        %1048 = vmatpush1.msra.mxu0 0.0
        %1049 = vmatprep.subr.mxu0 0.0
        %1050 = vmatpush1.msra.mxu0 0.0
        %1051 = vmatprep.subr.mxu0 0.0
        %1052 = vmatpush1.msra.mxu0 0.0
        %1053 = vmatprep.subr.mxu0 0.0
        %1054 = vmatpush1.msra.mxu0 0.0
        %1055 = vmatprep.subr.mxu0 0.0
        %1056 = vmatpush1.msra.mxu0 0.0
        %1057 = vmatprep.subr.mxu0 0.0
        %1058 = vmatpush1.msra.mxu0 0.0
        %1059 = vmatprep.subr.mxu0 0.0
        %1060 = vmatpush1.msra.mxu0 0.0
        %1061 = vmatprep.subr.mxu0 0.0
        %1062 = vmatpush1.msra.mxu0 0.0
        %1063 = vmatprep.subr.mxu0 0.0
        %1064 = vmatpush1.msra.mxu0 0.0
        %1065 = vmatprep.subr.mxu0 0.0
        %1066 = vmatpush1.msra.mxu0 0.0
        %1067 = vmatprep.subr.mxu0 0.0
        %1068 = vmatpush1.msra.mxu0 0.0
        %1069 = vmatprep.subr.mxu0 0.0
        %1070 = vmatpush1.msra.mxu0 0.0
        %1071 = vmatprep.subr.mxu0 0.0
        %1072 = vmatpush1.msra.mxu0 0.0
        %1073 = vmatprep.subr.mxu0 0.0
        %1074 = vmatpush1.msra.mxu0 0.0
        %1075 = vmatprep.subr.mxu0 0.0
        %1076 = vmatpush1.msra.mxu0 0.0
        %1077 = vmatprep.subr.mxu0 0.0
        %1078 = vmatpush1.msra.mxu0 0.0
        %1079 = vmatprep.subr.mxu0 0.0
        %1080 = vmatpush1.msra.mxu0 0.0
        %1081 = vmatprep.subr.mxu0 0.0
        %1082 = vmatpush1.msra.mxu0 0.0
        %1083 = vmatprep.subr.mxu0 0.0
        %1084 = vmatpush1.msra.mxu0 0.0
        %1085 = vmatprep.subr.mxu0 0.0
        %1086 = vmatpush1.msra.mxu0 0.0
        %1087 = vmatprep.subr.mxu0 0.0
        %1088 = vmatpush1.msra.mxu0 0.0
        %1089 = vmatprep.subr.mxu0 0.0
        %1090 = vmatpush1.msra.mxu0 0.0
        %1091 = vmatprep.subr.mxu0 0.0
        %1092 = vmatpush1.msra.mxu0 0.0
        %1093 = vmatprep.subr.mxu0 0.0
        %1094 = vmatpush1.msra.mxu0 0.0
        %1095 = vmatprep.subr.mxu0 0.0
        %1096 = vmatpush1.msra.mxu0 0.0
        %1097 = vmatprep.subr.mxu0 0.0
        %1098 = vmatpush1.msra.mxu0 0.0
        %1099 = vmatprep.subr.mxu0 0.0
        %1100 = vmatpush1.msra.mxu0 0.0
        %1101 = vmatprep.subr.mxu0 0.0
        %1102 = vmatpush1.msra.mxu0 0.0
        %1103 = vmatprep.subr.mxu0 0.0
        %1104 = vmatpush1.msra.mxu0 0.0
        %1105 = vmatprep.mubr.f32.mxu0 0.0
        %1106 = vmatmul.mubr.f32.gmra.mrb[0].mxu0 %v1039
        %v1107 = vpop.f32.mrb[0].mxu0
        %v1108 = vadd.f32 %v1035, %v1107
        %v1109 = vpop.f32.mrb[0].mxu0
        %1110 = vdwg.mxu0
        %1111 = vrot.lane.b32.xlu0 %v477, 112
        %v1112 = vpop.permute.xlu0 %1111
        %1113 = vrot.lane.b32.xlu0 %v554, 112
        %v1114 = vpop.permute.xlu0 %1113
        %v1115 = vsel %vm631, %v1112, 0
        %v1117 = vsel %vm631, %v1114, 0
        %1119 = vmatprep.subr.mxu0 0.0
        %1120 = vmatpush1.xpose.msra.mxu0 %v1117
        %1121 = vmatprep.subr.mxu0 0.0
        %1122 = vmatpush1.xpose.msra.mxu0 0.0
        %1123 = vmatprep.subr.mxu0 0.0
        %1124 = vmatpush1.xpose.msra.mxu0 0.0
        %1125 = vmatprep.subr.mxu0 0.0
        %1126 = vmatpush1.xpose.msra.mxu0 0.0
        %1127 = vmatprep.subr.mxu0 0.0
        %1128 = vmatpush1.xpose.msra.mxu0 0.0
        %1129 = vmatprep.subr.mxu0 0.0
        %1130 = vmatpush1.xpose.msra.mxu0 0.0
        %1131 = vmatprep.subr.mxu0 0.0
        %1132 = vmatpush1.xpose.msra.mxu0 0.0
        %1133 = vmatprep.subr.mxu0 0.0
        %1134 = vmatpush1.xpose.msra.mxu0 0.0
        %1135 = vmatprep.subr.mxu0 0.0
        %1136 = vmatpush1.xpose.msra.mxu0 0.0
        %1137 = vmatprep.subr.mxu0 0.0
        %1138 = vmatpush1.xpose.msra.mxu0 0.0
        %1139 = vmatprep.subr.mxu0 0.0
        %1140 = vmatpush1.xpose.msra.mxu0 0.0
        %1141 = vmatprep.subr.mxu0 0.0
        %1142 = vmatpush1.xpose.msra.mxu0 0.0
        %1143 = vmatprep.subr.mxu0 0.0
        %1144 = vmatpush1.xpose.msra.mxu0 0.0
        %1145 = vmatprep.subr.mxu0 0.0
        %1146 = vmatpush1.xpose.msra.mxu0 0.0
        %1147 = vmatprep.subr.mxu0 0.0
        %1148 = vmatpush1.xpose.msra.mxu0 0.0
        %1149 = vmatprep.subr.mxu0 0.0
        %1150 = vmatpush1.xpose.msra.mxu0 0.0
        %1151 = vmatprep.subr.mxu0 0.0
        %1152 = vmatpush1.xpose.msra.mxu0 0.0
        %1153 = vmatprep.subr.mxu0 0.0
        %1154 = vmatpush1.xpose.msra.mxu0 0.0
        %1155 = vmatprep.subr.mxu0 0.0
        %1156 = vmatpush1.xpose.msra.mxu0 0.0
        %1157 = vmatprep.subr.mxu0 0.0
        %1158 = vmatpush1.xpose.msra.mxu0 0.0
        %1159 = vmatprep.subr.mxu0 0.0
        %1160 = vmatpush1.xpose.msra.mxu0 0.0
        %1161 = vmatprep.subr.mxu0 0.0
        %1162 = vmatpush1.xpose.msra.mxu0 0.0
        %1163 = vmatprep.subr.mxu0 0.0
        %1164 = vmatpush1.xpose.msra.mxu0 0.0
        %1165 = vmatprep.subr.mxu0 0.0
        %1166 = vmatpush1.xpose.msra.mxu0 0.0
        %1167 = vmatprep.subr.mxu0 0.0
        %1168 = vmatpush1.xpose.msra.mxu0 0.0
        %1169 = vmatprep.subr.mxu0 0.0
        %1170 = vmatpush1.xpose.msra.mxu0 0.0
        %1171 = vmatprep.subr.mxu0 0.0
        %1172 = vmatpush1.xpose.msra.mxu0 0.0
        %1173 = vmatprep.subr.mxu0 0.0
        %1174 = vmatpush1.xpose.msra.mxu0 0.0
        %1175 = vmatprep.subr.mxu0 0.0
        %1176 = vmatpush1.xpose.msra.mxu0 0.0
        %1177 = vmatprep.subr.mxu0 0.0
        %1178 = vmatpush1.xpose.msra.mxu0 0.0
        %1179 = vmatprep.subr.mxu0 0.0
        %1180 = vmatpush1.xpose.msra.mxu0 0.0
        %1181 = vmatprep.subr.mxu0 0.0
        %1182 = vmatpush1.xpose.msra.mxu0 0.0
        %1183 = vmatprep.mubr.f32.mxu0 0.0
        %1184 = vmatmul.mubr.f32.gmra.mrb[0].mxu0 %v1115
        %v1185 = vpop.f32.mrb[0].mxu0
        %v1186 = vadd.f32 0.0, %v1185
        %v1187 = vpop.f32.mrb[0].mxu0
        %1188 = vdwg.mxu0
        %v1189 = vmul.f32 %v1186, 0.35355338
        %v1190 = vsel %vm631, %v1189, -inf
        %1191 = vmax.xlane.f32.xlu0 %v1190
        %v1192 = vpop.xlane.xlu0 %1191
        %v1193 = vsub.f32 %v1189, %v1192
        %v1194 = vmul.f32 %v1193, 1.442695
        %v1195 = vpow.pop %v1194
        %v1196 = vsel %vm631, %v1195, 0.0
        %1197 = vadd.xlane.f32.xlu0 %v1196
        %v1198 = vpop.xlane.xlu0 %1197
        %v1199 = vrcp.pop %v1198
        %v1200 = vmul.f32 %v1195, %v1199
        %s1201 = scalar_lea.vmem %s399, 16 [#allocation14]
        %1202 = vst.msk [vmem:[%s1201] sm:$0xff] %vm631, %v1200
        %1203 = vrot.lane.b32.xlu0 %v628, 112
        %v1204 = vpop.permute.xlu0 %1203
        %v1207 = vsel %vm631, %v1200, 0
        %1209 = vmatprep.subr.mxu0 0.0
        %1210 = vmatpush1.msra.mxu0 %v1204
        %1211 = vmatprep.subr.mxu0 0.0
        %1212 = vmatpush1.msra.mxu0 0.0
        %1213 = vmatprep.subr.mxu0 0.0
        %1214 = vmatpush1.msra.mxu0 0.0
        %1215 = vmatprep.subr.mxu0 0.0
        %1216 = vmatpush1.msra.mxu0 0.0
        %1217 = vmatprep.subr.mxu0 0.0
        %1218 = vmatpush1.msra.mxu0 0.0
        %1219 = vmatprep.subr.mxu0 0.0
        %1220 = vmatpush1.msra.mxu0 0.0
        %1221 = vmatprep.subr.mxu0 0.0
        %1222 = vmatpush1.msra.mxu0 0.0
        %1223 = vmatprep.subr.mxu0 0.0
        %1224 = vmatpush1.msra.mxu0 0.0
        %1225 = vmatprep.subr.mxu0 0.0
        %1226 = vmatpush1.msra.mxu0 0.0
        %1227 = vmatprep.subr.mxu0 0.0
        %1228 = vmatpush1.msra.mxu0 0.0
        %1229 = vmatprep.subr.mxu0 0.0
        %1230 = vmatpush1.msra.mxu0 0.0
        %1231 = vmatprep.subr.mxu0 0.0
        %1232 = vmatpush1.msra.mxu0 0.0
        %1233 = vmatprep.subr.mxu0 0.0
        %1234 = vmatpush1.msra.mxu0 0.0
        %1235 = vmatprep.subr.mxu0 0.0
        %1236 = vmatpush1.msra.mxu0 0.0
        %1237 = vmatprep.subr.mxu0 0.0
        %1238 = vmatpush1.msra.mxu0 0.0
        %1239 = vmatprep.subr.mxu0 0.0
        %1240 = vmatpush1.msra.mxu0 0.0
        %1241 = vmatprep.subr.mxu0 0.0
        %1242 = vmatpush1.msra.mxu0 0.0
        %1243 = vmatprep.subr.mxu0 0.0
        %1244 = vmatpush1.msra.mxu0 0.0
        %1245 = vmatprep.subr.mxu0 0.0
        %1246 = vmatpush1.msra.mxu0 0.0
        %1247 = vmatprep.subr.mxu0 0.0
        %1248 = vmatpush1.msra.mxu0 0.0
        %1249 = vmatprep.subr.mxu0 0.0
        %1250 = vmatpush1.msra.mxu0 0.0
        %1251 = vmatprep.subr.mxu0 0.0
        %1252 = vmatpush1.msra.mxu0 0.0
        %1253 = vmatprep.subr.mxu0 0.0
        %1254 = vmatpush1.msra.mxu0 0.0
        %1255 = vmatprep.subr.mxu0 0.0
        %1256 = vmatpush1.msra.mxu0 0.0
        %1257 = vmatprep.subr.mxu0 0.0
        %1258 = vmatpush1.msra.mxu0 0.0
        %1259 = vmatprep.subr.mxu0 0.0
        %1260 = vmatpush1.msra.mxu0 0.0
        %1261 = vmatprep.subr.mxu0 0.0
        %1262 = vmatpush1.msra.mxu0 0.0
        %1263 = vmatprep.subr.mxu0 0.0
        %1264 = vmatpush1.msra.mxu0 0.0
        %1265 = vmatprep.subr.mxu0 0.0
        %1266 = vmatpush1.msra.mxu0 0.0
        %1267 = vmatprep.subr.mxu0 0.0
        %1268 = vmatpush1.msra.mxu0 0.0
        %1269 = vmatprep.subr.mxu0 0.0
        %1270 = vmatpush1.msra.mxu0 0.0
        %1271 = vmatprep.subr.mxu0 0.0
        %1272 = vmatpush1.msra.mxu0 0.0
        %1273 = vmatprep.mubr.f32.mxu0 0.0
        %1274 = vmatmul.mubr.f32.gmra.mrb[0].mxu0 %v1207
        %v1275 = vpop.f32.mrb[0].mxu0
        %v1276 = vadd.f32 0.0, %v1275
        %v1277 = vpop.f32.mrb[0].mxu0
        %1278 = vdwg.mxu0
        %v1279 = vld [vmem:[#allocation11 + $0x10] sm:$0xff]
        %v1281 = vsel %vm631, %v1276, 0
        %1283 = vmatprep.subr.mxu0 0.0
        %1284 = vmatpush1.msra.mxu0 %v1279
        %1285 = vmatprep.subr.mxu0 0.0
        %1286 = vmatpush1.msra.mxu0 0.0
        %1287 = vmatprep.subr.mxu0 0.0
        %1288 = vmatpush1.msra.mxu0 0.0
        %1289 = vmatprep.subr.mxu0 0.0
        %1290 = vmatpush1.msra.mxu0 0.0
        %1291 = vmatprep.subr.mxu0 0.0
        %1292 = vmatpush1.msra.mxu0 0.0
        %1293 = vmatprep.subr.mxu0 0.0
        %1294 = vmatpush1.msra.mxu0 0.0
        %1295 = vmatprep.subr.mxu0 0.0
        %1296 = vmatpush1.msra.mxu0 0.0
        %1297 = vmatprep.subr.mxu0 0.0
        %1298 = vmatpush1.msra.mxu0 0.0
        %1299 = vmatprep.subr.mxu0 0.0
        %1300 = vmatpush1.msra.mxu0 0.0
        %1301 = vmatprep.subr.mxu0 0.0
        %1302 = vmatpush1.msra.mxu0 0.0
        %1303 = vmatprep.subr.mxu0 0.0
        %1304 = vmatpush1.msra.mxu0 0.0
        %1305 = vmatprep.subr.mxu0 0.0
        %1306 = vmatpush1.msra.mxu0 0.0
        %1307 = vmatprep.subr.mxu0 0.0
        %1308 = vmatpush1.msra.mxu0 0.0
        %1309 = vmatprep.subr.mxu0 0.0
        %1310 = vmatpush1.msra.mxu0 0.0
        %1311 = vmatprep.subr.mxu0 0.0
        %1312 = vmatpush1.msra.mxu0 0.0
        %1313 = vmatprep.subr.mxu0 0.0
        %1314 = vmatpush1.msra.mxu0 0.0
        %1315 = vmatprep.subr.mxu0 0.0
        %1316 = vmatpush1.msra.mxu0 0.0
        %1317 = vmatprep.subr.mxu0 0.0
        %1318 = vmatpush1.msra.mxu0 0.0
        %1319 = vmatprep.subr.mxu0 0.0
        %1320 = vmatpush1.msra.mxu0 0.0
        %1321 = vmatprep.subr.mxu0 0.0
        %1322 = vmatpush1.msra.mxu0 0.0
        %1323 = vmatprep.subr.mxu0 0.0
        %1324 = vmatpush1.msra.mxu0 0.0
        %1325 = vmatprep.subr.mxu0 0.0
        %1326 = vmatpush1.msra.mxu0 0.0
        %1327 = vmatprep.subr.mxu0 0.0
        %1328 = vmatpush1.msra.mxu0 0.0
        %1329 = vmatprep.subr.mxu0 0.0
        %1330 = vmatpush1.msra.mxu0 0.0
        %1331 = vmatprep.subr.mxu0 0.0
        %1332 = vmatpush1.msra.mxu0 0.0
        %1333 = vmatprep.subr.mxu0 0.0
        %1334 = vmatpush1.msra.mxu0 0.0
        %1335 = vmatprep.subr.mxu0 0.0
        %1336 = vmatpush1.msra.mxu0 0.0
        %1337 = vmatprep.subr.mxu0 0.0
        %1338 = vmatpush1.msra.mxu0 0.0
        %1339 = vmatprep.subr.mxu0 0.0
        %1340 = vmatpush1.msra.mxu0 0.0
        %1341 = vmatprep.subr.mxu0 0.0
        %1342 = vmatpush1.msra.mxu0 0.0
        %1343 = vmatprep.subr.mxu0 0.0
        %1344 = vmatpush1.msra.mxu0 0.0
        %1345 = vmatprep.subr.mxu0 0.0
        %1346 = vmatpush1.msra.mxu0 0.0
        %1347 = vmatprep.mubr.f32.mxu0 0.0
        %1348 = vmatmul.mubr.f32.gmra.mrb[0].mxu0 %v1281
        %v1349 = vpop.f32.mrb[0].mxu0
        %v1350 = vadd.f32 0.0, %v1349
        %v1351 = vpop.f32.mrb[0].mxu0
        %1352 = vdwg.mxu0
        %v1353 = vadd.f32 %v1108, %v1350
        %1354 = vrot.lane.b32.xlu0 %v477, 104
        %v1355 = vpop.permute.xlu0 %1354
        %1356 = vrot.lane.b32.xlu0 %v554, 104
        %v1357 = vpop.permute.xlu0 %1356
        %v1358 = vsel %vm631, %v1355, 0
        %v1360 = vsel %vm631, %v1357, 0
        %1362 = vmatprep.subr.mxu0 0.0
        %1363 = vmatpush1.xpose.msra.mxu0 %v1360
        %1364 = vmatprep.subr.mxu0 0.0
        %1365 = vmatpush1.xpose.msra.mxu0 0.0
        %1366 = vmatprep.subr.mxu0 0.0
        %1367 = vmatpush1.xpose.msra.mxu0 0.0
        %1368 = vmatprep.subr.mxu0 0.0
        %1369 = vmatpush1.xpose.msra.mxu0 0.0
        %1370 = vmatprep.subr.mxu0 0.0
        %1371 = vmatpush1.xpose.msra.mxu0 0.0
        %1372 = vmatprep.subr.mxu0 0.0
        %1373 = vmatpush1.xpose.msra.mxu0 0.0
        %1374 = vmatprep.subr.mxu0 0.0
        %1375 = vmatpush1.xpose.msra.mxu0 0.0
        %1376 = vmatprep.subr.mxu0 0.0
        %1377 = vmatpush1.xpose.msra.mxu0 0.0
        %1378 = vmatprep.subr.mxu0 0.0
        %1379 = vmatpush1.xpose.msra.mxu0 0.0
        %1380 = vmatprep.subr.mxu0 0.0
        %1381 = vmatpush1.xpose.msra.mxu0 0.0
        %1382 = vmatprep.subr.mxu0 0.0
        %1383 = vmatpush1.xpose.msra.mxu0 0.0
        %1384 = vmatprep.subr.mxu0 0.0
        %1385 = vmatpush1.xpose.msra.mxu0 0.0
        %1386 = vmatprep.subr.mxu0 0.0
        %1387 = vmatpush1.xpose.msra.mxu0 0.0
        %1388 = vmatprep.subr.mxu0 0.0
        %1389 = vmatpush1.xpose.msra.mxu0 0.0
        %1390 = vmatprep.subr.mxu0 0.0
        %1391 = vmatpush1.xpose.msra.mxu0 0.0
        %1392 = vmatprep.subr.mxu0 0.0
        %1393 = vmatpush1.xpose.msra.mxu0 0.0
        %1394 = vmatprep.subr.mxu0 0.0
        %1395 = vmatpush1.xpose.msra.mxu0 0.0
        %1396 = vmatprep.subr.mxu0 0.0
        %1397 = vmatpush1.xpose.msra.mxu0 0.0
        %1398 = vmatprep.subr.mxu0 0.0
        %1399 = vmatpush1.xpose.msra.mxu0 0.0
        %1400 = vmatprep.subr.mxu0 0.0
        %1401 = vmatpush1.xpose.msra.mxu0 0.0
        %1402 = vmatprep.subr.mxu0 0.0
        %1403 = vmatpush1.xpose.msra.mxu0 0.0
        %1404 = vmatprep.subr.mxu0 0.0
        %1405 = vmatpush1.xpose.msra.mxu0 0.0
        %1406 = vmatprep.subr.mxu0 0.0
        %1407 = vmatpush1.xpose.msra.mxu0 0.0
        %1408 = vmatprep.subr.mxu0 0.0
        %1409 = vmatpush1.xpose.msra.mxu0 0.0
        %1410 = vmatprep.subr.mxu0 0.0
        %1411 = vmatpush1.xpose.msra.mxu0 0.0
        %1412 = vmatprep.subr.mxu0 0.0
        %1413 = vmatpush1.xpose.msra.mxu0 0.0
        %1414 = vmatprep.subr.mxu0 0.0
        %1415 = vmatpush1.xpose.msra.mxu0 0.0
        %1416 = vmatprep.subr.mxu0 0.0
        %1417 = vmatpush1.xpose.msra.mxu0 0.0
        %1418 = vmatprep.subr.mxu0 0.0
        %1419 = vmatpush1.xpose.msra.mxu0 0.0
        %1420 = vmatprep.subr.mxu0 0.0
        %1421 = vmatpush1.xpose.msra.mxu0 0.0
        %1422 = vmatprep.subr.mxu0 0.0
        %1423 = vmatpush1.xpose.msra.mxu0 0.0
        %1424 = vmatprep.subr.mxu0 0.0
        %1425 = vmatpush1.xpose.msra.mxu0 0.0
        %1426 = vmatprep.mubr.f32.mxu0 0.0
        %1427 = vmatmul.mubr.f32.gmra.mrb[0].mxu0 %v1358
        %v1428 = vpop.f32.mrb[0].mxu0
        %v1429 = vadd.f32 0.0, %v1428
        %v1430 = vpop.f32.mrb[0].mxu0
        %1431 = vdwg.mxu0
        %v1432 = vmul.f32 %v1429, 0.35355338
        %v1433 = vsel %vm631, %v1432, -inf
        %1434 = vmax.xlane.f32.xlu0 %v1433
        %v1435 = vpop.xlane.xlu0 %1434
        %v1436 = vsub.f32 %v1432, %v1435
        %v1437 = vmul.f32 %v1436, 1.442695
        %v1438 = vpow.pop %v1437
        %v1439 = vsel %vm631, %v1438, 0.0
        %1440 = vadd.xlane.f32.xlu0 %v1439
        %v1441 = vpop.xlane.xlu0 %1440
        %v1442 = vrcp.pop %v1441
        %v1443 = vmul.f32 %v1438, %v1442
        %s1444 = scalar_lea.vmem %s399, 24 [#allocation14]
        %1445 = vst.msk [vmem:[%s1444] sm:$0xff] %vm631, %v1443
        %1446 = vrot.lane.b32.xlu0 %v628, 104
        %v1447 = vpop.permute.xlu0 %1446
        %v1450 = vsel %vm631, %v1443, 0
        %1452 = vmatprep.subr.mxu0 0.0
        %1453 = vmatpush1.msra.mxu0 %v1447
        %1454 = vmatprep.subr.mxu0 0.0
        %1455 = vmatpush1.msra.mxu0 0.0
        %1456 = vmatprep.subr.mxu0 0.0
        %1457 = vmatpush1.msra.mxu0 0.0
        %1458 = vmatprep.subr.mxu0 0.0
        %1459 = vmatpush1.msra.mxu0 0.0
        %1460 = vmatprep.subr.mxu0 0.0
        %1461 = vmatpush1.msra.mxu0 0.0
        %1462 = vmatprep.subr.mxu0 0.0
        %1463 = vmatpush1.msra.mxu0 0.0
        %1464 = vmatprep.subr.mxu0 0.0
        %1465 = vmatpush1.msra.mxu0 0.0
        %1466 = vmatprep.subr.mxu0 0.0
        %1467 = vmatpush1.msra.mxu0 0.0
        %1468 = vmatprep.subr.mxu0 0.0
        %1469 = vmatpush1.msra.mxu0 0.0
        %1470 = vmatprep.subr.mxu0 0.0
        %1471 = vmatpush1.msra.mxu0 0.0
        %1472 = vmatprep.subr.mxu0 0.0
        %1473 = vmatpush1.msra.mxu0 0.0
        %1474 = vmatprep.subr.mxu0 0.0
        %1475 = vmatpush1.msra.mxu0 0.0
        %1476 = vmatprep.subr.mxu0 0.0
        %1477 = vmatpush1.msra.mxu0 0.0
        %1478 = vmatprep.subr.mxu0 0.0
        %1479 = vmatpush1.msra.mxu0 0.0
        %1480 = vmatprep.subr.mxu0 0.0
        %1481 = vmatpush1.msra.mxu0 0.0
        %1482 = vmatprep.subr.mxu0 0.0
        %1483 = vmatpush1.msra.mxu0 0.0
        %1484 = vmatprep.subr.mxu0 0.0
        %1485 = vmatpush1.msra.mxu0 0.0
        %1486 = vmatprep.subr.mxu0 0.0
        %1487 = vmatpush1.msra.mxu0 0.0
        %1488 = vmatprep.subr.mxu0 0.0
        %1489 = vmatpush1.msra.mxu0 0.0
        %1490 = vmatprep.subr.mxu0 0.0
        %1491 = vmatpush1.msra.mxu0 0.0
        %1492 = vmatprep.subr.mxu0 0.0
        %1493 = vmatpush1.msra.mxu0 0.0
        %1494 = vmatprep.subr.mxu0 0.0
        %1495 = vmatpush1.msra.mxu0 0.0
        %1496 = vmatprep.subr.mxu0 0.0
        %1497 = vmatpush1.msra.mxu0 0.0
        %1498 = vmatprep.subr.mxu0 0.0
        %1499 = vmatpush1.msra.mxu0 0.0
        %1500 = vmatprep.subr.mxu0 0.0
        %1501 = vmatpush1.msra.mxu0 0.0
        %1502 = vmatprep.subr.mxu0 0.0
        %1503 = vmatpush1.msra.mxu0 0.0
        %1504 = vmatprep.subr.mxu0 0.0
        %1505 = vmatpush1.msra.mxu0 0.0
        %1506 = vmatprep.subr.mxu0 0.0
        %1507 = vmatpush1.msra.mxu0 0.0
        %1508 = vmatprep.subr.mxu0 0.0
        %1509 = vmatpush1.msra.mxu0 0.0
        %1510 = vmatprep.subr.mxu0 0.0
        %1511 = vmatpush1.msra.mxu0 0.0
        %1512 = vmatprep.subr.mxu0 0.0
        %1513 = vmatpush1.msra.mxu0 0.0
        %1514 = vmatprep.subr.mxu0 0.0
        %1515 = vmatpush1.msra.mxu0 0.0
        %1516 = vmatprep.mubr.f32.mxu0 0.0
        %1517 = vmatmul.mubr.f32.gmra.mrb[0].mxu0 %v1450
        %v1518 = vpop.f32.mrb[0].mxu0
        %v1519 = vadd.f32 0.0, %v1518
        %v1520 = vpop.f32.mrb[0].mxu0
        %1521 = vdwg.mxu0
        %v1522 = vld [vmem:[#allocation11 + $0x18] sm:$0xff]
        %v1524 = vsel %vm631, %v1519, 0
        %1526 = vmatprep.subr.mxu0 0.0
        %1527 = vmatpush1.msra.mxu0 %v1522
        %1528 = vmatprep.subr.mxu0 0.0
        %1529 = vmatpush1.msra.mxu0 0.0
        %1530 = vmatprep.subr.mxu0 0.0
        %1531 = vmatpush1.msra.mxu0 0.0
        %1532 = vmatprep.subr.mxu0 0.0
        %1533 = vmatpush1.msra.mxu0 0.0
        %1534 = vmatprep.subr.mxu0 0.0
        %1535 = vmatpush1.msra.mxu0 0.0
        %1536 = vmatprep.subr.mxu0 0.0
        %1537 = vmatpush1.msra.mxu0 0.0
        %1538 = vmatprep.subr.mxu0 0.0
        %1539 = vmatpush1.msra.mxu0 0.0
        %1540 = vmatprep.subr.mxu0 0.0
        %1541 = vmatpush1.msra.mxu0 0.0
        %1542 = vmatprep.subr.mxu0 0.0
        %1543 = vmatpush1.msra.mxu0 0.0
        %1544 = vmatprep.subr.mxu0 0.0
        %1545 = vmatpush1.msra.mxu0 0.0
        %1546 = vmatprep.subr.mxu0 0.0
        %1547 = vmatpush1.msra.mxu0 0.0
        %1548 = vmatprep.subr.mxu0 0.0
        %1549 = vmatpush1.msra.mxu0 0.0
        %1550 = vmatprep.subr.mxu0 0.0
        %1551 = vmatpush1.msra.mxu0 0.0
        %1552 = vmatprep.subr.mxu0 0.0
        %1553 = vmatpush1.msra.mxu0 0.0
        %1554 = vmatprep.subr.mxu0 0.0
        %1555 = vmatpush1.msra.mxu0 0.0
        %1556 = vmatprep.subr.mxu0 0.0
        %1557 = vmatpush1.msra.mxu0 0.0
        %1558 = vmatprep.subr.mxu0 0.0
        %1559 = vmatpush1.msra.mxu0 0.0
        %1560 = vmatprep.subr.mxu0 0.0
        %1561 = vmatpush1.msra.mxu0 0.0
        %1562 = vmatprep.subr.mxu0 0.0
        %1563 = vmatpush1.msra.mxu0 0.0
        %1564 = vmatprep.subr.mxu0 0.0
        %1565 = vmatpush1.msra.mxu0 0.0
        %1566 = vmatprep.subr.mxu0 0.0
        %1567 = vmatpush1.msra.mxu0 0.0
        %1568 = vmatprep.subr.mxu0 0.0
        %1569 = vmatpush1.msra.mxu0 0.0
        %1570 = vmatprep.subr.mxu0 0.0
        %1571 = vmatpush1.msra.mxu0 0.0
        %1572 = vmatprep.subr.mxu0 0.0
        %1573 = vmatpush1.msra.mxu0 0.0
        %1574 = vmatprep.subr.mxu0 0.0
        %1575 = vmatpush1.msra.mxu0 0.0
        %1576 = vmatprep.subr.mxu0 0.0
        %1577 = vmatpush1.msra.mxu0 0.0
        %1578 = vmatprep.subr.mxu0 0.0
        %1579 = vmatpush1.msra.mxu0 0.0
        %1580 = vmatprep.subr.mxu0 0.0
        %1581 = vmatpush1.msra.mxu0 0.0
        %1582 = vmatprep.subr.mxu0 0.0
        %1583 = vmatpush1.msra.mxu0 0.0
        %1584 = vmatprep.subr.mxu0 0.0
        %1585 = vmatpush1.msra.mxu0 0.0
        %1586 = vmatprep.subr.mxu0 0.0
        %1587 = vmatpush1.msra.mxu0 0.0
        %1588 = vmatprep.subr.mxu0 0.0
        %1589 = vmatpush1.msra.mxu0 0.0
        %1590 = vmatprep.mubr.f32.mxu0 0.0
        %1591 = vmatmul.mubr.f32.gmra.mrb[0].mxu0 %v1524
        %v1592 = vpop.f32.mrb[0].mxu0
        %v1593 = vadd.f32 0.0, %v1592
        %v1594 = vpop.f32.mrb[0].mxu0
        %1595 = vdwg.mxu0
        %v1596 = vadd.f32 %v1353, %v1593
        %1597 = vst.msk [vmem:[%s392] sm:$0xff] %vm406, %v1596
        %s1598 = sand.u32 %s177, 1
        %s1599 = scalar_lea.sflag [#allocation4], %s1598
        %s1600 = sand.u32 %s177, 1
        %s1601 = smul.addr %s1600, 8
        %s1602 = scalar_lea.vmem [#allocation13], %s1601
        %s1603 = sand.u32 %s203, 1
        %s1604 = scalar_lea.sflag [#allocation15], %s1603
        %s1605 = sand.u32 %s203, 1
        %s1606 = smul.addr %s1605, 32
        %s1607 = scalar_lea.vmem [#allocation14], %s1606
        // Predicated region
        $region69: #{tpu_custom_call.1} parent=43 // pred_check
          %p1608 = pneg %p187
        $region70: #{tpu_custom_call.1} parent=43 // pred_check_branch
          %1610 = sbr.rel (%p1608) target = $region72
        $region71: #{tpu_custom_call.1} parent=43 // pred_region
          %s1612 = ssub.s32 128, 128
          %1613 = vsyncadd %s1599, %s1612
          %s1614 = smul.addr %s33, 128
          %s1615 = scalar_lea.hbm %s6, %s1614
          %s1617 = sshll.u32 %s1602, 4
          %s1618 = int_to_ptr.vmem [resolvable:$true] %s1617
          %1620 = dma.vmem_to_hbm [thread:$0]  %s1618, 128, %s1615, %s1599
        $region72: #{tpu_custom_call.1} parent=43 // pred_fallthru
          _
        // Predicated region
        $region73: #{tpu_custom_call.1} parent=43 // pred_check
          %p1621 = pneg %p213
        $region74: #{tpu_custom_call.1} parent=43 // pred_check_branch
          %1623 = sbr.rel (%p1621) target = $region76
        $region75: #{tpu_custom_call.1} parent=43 // pred_region
          %s1625 = ssub.s32 512, 512
          %1626 = vsyncadd %s1604, %s1625
          %s1627 = smul.addr %s33, 4
          %s1628 = smul.addr %s1627, 128
          %s1629 = scalar_lea.hbm %s7, %s1628
          %s1630 = sshll.u32 %s1607, 4
          %s1631 = int_to_ptr.vmem [resolvable:$true] %s1630
          %1636 = dma.vmem_to_hbm [thread:$0]  %s1631, 512, %s1629, %s1604, 128, 128, 8
        $region76: #{tpu_custom_call.1} parent=43 // pred_fallthru
          _
      $region44: #{tpu_custom_call.1} parent=5 // pred_fallthru
        _
      %p1637 = scmp.le.s32.totalorder 2, %s28
      // Predicated region
      $region77: #{tpu_custom_call.1} parent=5 // pred_check
        %p1638 = pneg %p1637
      $region78: #{tpu_custom_call.1} parent=5 // pred_check_branch
        %1640 = sbr.rel (%p1638) target = $region80
      $region79: #{tpu_custom_call.1} parent=5 // pred_region
        %s1641 = ssub.s32 %s28, 2
        // Predicated region
        $region81: #{tpu_custom_call.1} parent=79 // pred_check
          %p1642 = pneg %p193
        $region82: #{tpu_custom_call.1} parent=79 // pred_check_branch
          %1644 = sbr.rel (%p1642) target = $region84
        $region83: #{tpu_custom_call.1} parent=79 // pred_region
          %s1645 = sand.u32 %s178, 1
          %s1646 = scalar_lea.sflag [#allocation4], %s1645
          %s1647 = sand.u32 %s178, 1
          %s1648 = smul.addr %s1647, 8
          %s1649 = scalar_lea.vmem [#allocation13], %s1648
          %1650 = dma.done %s1646, 128
        $region84: #{tpu_custom_call.1} parent=79 // pred_fallthru
          _
        // Predicated region
        $region85: #{tpu_custom_call.1} parent=79 // pred_check
          %p1651 = pneg %p219
        $region86: #{tpu_custom_call.1} parent=79 // pred_check_branch
          %1653 = sbr.rel (%p1651) target = $region88
        $region87: #{tpu_custom_call.1} parent=79 // pred_region
          %s1654 = sand.u32 %s204, 1
          %s1655 = scalar_lea.sflag [#allocation15], %s1654
          %s1656 = sand.u32 %s204, 1
          %s1657 = smul.addr %s1656, 32
          %s1658 = scalar_lea.vmem [#allocation14], %s1657
          %1659 = dma.done %s1655, 512
        $region88: #{tpu_custom_call.1} parent=79 // pred_fallthru
          _
      $region80: #{tpu_custom_call.1} parent=5 // pred_fallthru
        _
    $region6: #{tpu_custom_call.1} parent=1 // loop_footer
      %s32 = sadd.s32 1, %s28
    $region7: #{tpu_custom_call.1} parent=1 // loop_footer_branch
      %27 = sbr.rel target = $region3
    $region8: #{tpu_custom_call.1} parent=1 // loop_exit
      _
    %1660 = vsyncpa [#allocation3], 1
    %s1661 = scalar_lea.sflag [#allocation3], 1
    %1662 = vsyncpa %s1661, 1
    %1663 = vsyncpa [#allocation6], 1
    %s1664 = scalar_lea.sflag [#allocation6], 1
    %1665 = vsyncpa %s1664, 1
    %1666 = vsyncpa [#allocation9], 1
    %1667 = vsyncpa [#allocation12], 1
    %1668 = vsyncpa [#allocation4], 1
    %s1669 = scalar_lea.sflag [#allocation4], 1
    %1670 = vsyncpa %s1669, 1
    %1671 = vsyncpa [#allocation15], 1
    %s1672 = scalar_lea.sflag [#allocation15], 1
    %1673 = vsyncpa %s1672, 1

</llo_original>
